<compile_context>
chip_gen: v5e
topology: v5e:2x2
jax: 0.10.0
libtpu: 0.0.40
codegen_flags: <defaults>
</compile_context>

<pallas_src>
import jax
import jax.numpy as jnp
from jax.experimental import pallas as pl
from jax.experimental.pallas import tpu as pltpu


# ~2 MiB of x per grid step: 2x double-buffered input + 2x output + ~3 tile-sized f32
# intermediates ≈ 14 MiB, fitting v5e's 16 MiB scoped default and v6e/v7x's 32 MiB, while
# making the ~0.35 us per-step pipeline overhead negligible against HBM transfer time.
_TARGET_TILE_BYTES = 2 * 1024 * 1024
_VMEM_LIMIT_BYTES = 48 * 1024 * 1024      # headroom below v7x's 64 MiB physical VMEM


# ----------------------------------------------------------------------------
# Fused kernel:  out = x + W4 @ ( (W2 @ x + b2) * sigmoid(W1 @ x + b1) ) + b4
# ----------------------------------------------------------------------------
def _nlb_fused_kernel(x_ref, w12_ref, b12_ref, w4_ref, b4_ref, o_ref):
    # x_ref  : (Gb, K, ts)  activation tile; K = nf on sublanes, ts on lanes
    # w12_ref: (2K, K)      [W1; W2] stacked (out, in)
    # b12_ref: (2K, 1)      [b1; b2] stacked
    # w4_ref : (K, K), b4_ref: (K, 1)
    gb = x_ref.shape[0]
    nf = w4_ref.shape[0]
    w12 = w12_ref[...]
    b12 = b12_ref[...]
    w4 = w4_ref[...]
    b4 = b4_ref[...]

    def slab(g, carry):
        x = x_ref[g].astype(jnp.float32)                                    # (K, ts)
        # One MXU push for both pre-activations (W1/W2 stacked).
        pre = jnp.dot(w12, x, preferred_element_type=jnp.float32) + b12     # (2K, ts)
        gate = jax.nn.sigmoid(pre[:nf, :])
        val = pre[nf:, :] * gate
        y = jnp.dot(w4, val, preferred_element_type=jnp.float32) + b4       # (K, ts)
        o_ref[g] = (y + x).astype(o_ref.dtype)
        return carry

    # Kernel is HBM-bound, so the compute here is hidden behind DMA either way; unroll the
    # short group loops for LLO visibility, keep long ones rolled to bound code size.
    if gb <= 8:
        for g in range(gb):
            slab(g, None)
    else:
        jax.lax.fori_loop(0, gb, slab, None)


# ----------------------------------------------------------------------------
# Tiling
# ----------------------------------------------------------------------------
def _round_up(x, m):
    return ((x + m - 1) // m) * m


def _pick_tiles(G, K, S, itemsize, target_bytes):
    """Pick (gb, ts, S_pad): x block = (gb, K, ts) with gb | G, ts | S_pad, 128 | ts."""
    S_pad = _round_up(S, 128)                                # lane-dense (unmasked) stores
    max_ts = max(128, (target_bytes // (K * itemsize)) // 128 * 128)
    ts = min(S_pad, max_ts)
    while S_pad % ts:                                        # largest mult-of-128 divisor
        ts -= 128
    # Pack several G rows per step so the tile reaches ~target even when S is small
    # (temporal mode: S = H*W).
    gb_target = max(1, target_bytes // (K * ts * itemsize))
    gb = 1
    for cand in range(min(G, gb_target), 0, -1):             # largest divisor of G <= target
        if G % cand == 0:
            gb = cand
            break
    # v7x megacore: if everything collapsed into one large step, split it so both
    # TensorCores get a "parallel" step.
    if (G // gb) * (S_pad // ts) == 1 and gb * K * ts * itemsize > 512 * 1024:
        if ts % 256 == 0:
            ts //= 2
        elif gb % 2 == 0:
            gb //= 2
    return gb, ts, S_pad


def _fused_block(xm, w1, b1, w2, b2, w4, b4, target_bytes):
    # xm: (G, K, S); contraction axis is K (= nf).
    G, K, S = xm.shape
    itemsize = jnp.dtype(xm.dtype).itemsize
    gb, ts, S_pad = _pick_tiles(G, K, S, itemsize, target_bytes)

    if S_pad != S:
        # Pad the lane axis to a multiple of 128; padded columns are sliced off below.
        xm = jnp.pad(xm, ((0, 0), (0, 0), (0, S_pad - S)))

    f32 = jnp.float32
    w12 = jnp.concatenate([w1, w2], axis=0).astype(f32)                     # (2K, K)
    b12 = jnp.concatenate([b1, b2], axis=0).reshape(2 * K, 1).astype(f32)   # (2K, 1)
    w4c = w4.astype(f32)
    b4c = b4.reshape(K, 1).astype(f32)

    grid = (G // gb, S_pad // ts)
    x_spec = pl.BlockSpec((gb, K, ts), lambda g, s: (g, 0, s))

    out = pl.pallas_call(
        _nlb_fused_kernel,
        out_shape=jax.ShapeDtypeStruct((G, K, S_pad), xm.dtype),
        grid=grid,
        in_specs=[
            x_spec,
            pl.BlockSpec((2 * K, K), lambda g, s: (0, 0)),
            pl.BlockSpec((2 * K, 1), lambda g, s: (0, 0)),
            pl.BlockSpec((K, K), lambda g, s: (0, 0)),
            pl.BlockSpec((K, 1), lambda g, s: (0, 0)),
        ],
        out_specs=x_spec,
        # Each output block depends only on the same input block -> safe to alias; halves
        # HBM footprint whenever xm is a dead intermediate in the surrounding graph.
        input_output_aliases={0: 0},
        compiler_params=pltpu.CompilerParams(
            dimension_semantics=("parallel", "parallel"),
            vmem_limit_bytes=_VMEM_LIMIT_BYTES),
    )(xm, w12, b12, w4c, b4c)

    if S_pad != S:
        out = out[:, :, :S]
    return out


# ----------------------------------------------------------------------------
# Module forward
# ----------------------------------------------------------------------------
def simple_nonlocal_block_video(x1, p, mode, *, target_tile_bytes=_TARGET_TILE_BYTES):
    # x1: (N, C, T, H, W), same NCTHW layout as the PyTorch module.
    N, C, T, H, W = x1.shape
    nf = p["w1"].shape[0]
    if mode == "channel":
        if C != nf:
            raise ValueError(f"channel mode requires C == nf ({C} vs {nf})")
        xm = x1.reshape(N, C, T * H * W)                    # contract over C (zero-copy)
    elif mode == "temporal":
        if T != nf:
            raise ValueError(f"temporal mode requires T == nf ({T} vs {nf})")
        # permute(0,2,1,3,4) + 1x1x1 conv == contraction over T.
        xm = x1.reshape(N * C, T, H * W)                    # contract over T (zero-copy)
    else:
        # TODO(synk): 'spatial' mode passes the constructor assert in the reference but its
        # forward leaves `x` undefined and would raise; not implemented here.
        raise NotImplementedError("'spatial' mode is undefined in the reference forward")

    out = _fused_block(xm, p["w1"], p["b1"], p["w2"], p["b2"], p["w4"], p["b4"],
                       target_tile_bytes)
    return out.reshape(N, C, T, H, W)


# ----------------------------------------------------------------------------
# Params + pure-JAX reference (for correctness check)
# ----------------------------------------------------------------------------
def init_params(key, nf):
    keys = jax.random.split(key, 6)

    def unif(rng, shape, fan_in):
        bound = 1.0 / jnp.sqrt(jnp.float32(fan_in))
        return jax.random.uniform(rng, shape, jnp.float32, -bound, bound)

    return {
        "w1": unif(keys[0], (nf, nf), nf), "b1": unif(keys[1], (nf,), nf),
        "w2": unif(keys[2], (nf, nf), nf), "b2": unif(keys[3], (nf,), nf),
        "w4": unif(keys[4], (nf, nf), nf), "b4": unif(keys[5], (nf,), nf),
    }


def _ref_pointwise(z, w, b):
    # 1x1x1 Conv3d over axis 1 of (N, K, T, H, W)
    y = jnp.einsum("ok,nkthw->nothw", w, z, precision=jax.lax.Precision.HIGHEST)
    return y + b[None, :, None, None, None]


def reference(x1, p, mode):
    if mode == "channel":
        x = x1
        xA = jax.nn.sigmoid(_ref_pointwise(x, p["w1"], p["b1"]))
        xB = _ref_pointwise(x, p["w2"], p["b2"]) * xA
        x = _ref_pointwise(xB, p["w4"], p["b4"])
    elif mode == "temporal":
        x = jnp.transpose(x1, (0, 2, 1, 3, 4))
        xA = jax.nn.sigmoid(_ref_pointwise(x, p["w1"], p["b1"]))
        xB = _ref_pointwise(x, p["w2"], p["b2"]) * xA
        xB = _ref_pointwise(xB, p["w4"], p["b4"])
        x = jnp.transpose(xB, (0, 2, 1, 3, 4))
    else:
        raise NotImplementedError
    return x + x1


if __name__ == "__main__":
    key = jax.random.PRNGKey(0)
    k_x, k_p = jax.random.split(key)

    nf = 8
    params = init_params(k_p, nf)
    fwd = jax.jit(simple_nonlocal_block_video,
                  static_argnames=("mode", "target_tile_bytes"))

    # (N, nf, T, H, W); temporal mode needs T == nf.
    cases = [
        ((2, nf, 8, 16, 16), _TARGET_TILE_BYTES),  # default tiles (single big block per mode)
        ((2, nf, 8, 16, 16), 32 * 1024),           # small tiles -> multi-step 2-D grid
        ((1, nf, 8, 10, 12), _TARGET_TILE_BYTES),  # H*W not a multiple of 128 -> pad/slice path
    ]
    for shape, tile_bytes in cases:
        x = jax.random.normal(k_x, shape, jnp.float32)
        for mode in ("channel", "temporal"):
            out = fwd(x, params, mode, target_tile_bytes=tile_bytes)
            jax.block_until_ready(out)
            assert out.shape == x.shape
            ref = reference(x, params, mode)
            assert jnp.allclose(out, ref, atol=1e-4, rtol=1e-4), (
                f"mismatch: shape={shape} mode={mode} tile_bytes={tile_bytes}")

    print("KERNEL_OK")
</pallas_src>

<mosaic_0001>
module attributes {stable_mosaic.version = 11 : i64} {
  func.func @_nlb_fused_kernel(%arg0: i32, %arg1: i32, %arg2: memref<2x8x2048xf32, #tpu.memory_space<vmem>>, %arg3: memref<16x8xf32, #tpu.memory_space<vmem>>, %arg4: memref<16x1xf32, #tpu.memory_space<vmem>>, %arg5: memref<8x8xf32, #tpu.memory_space<vmem>>, %arg6: memref<8x1xf32, #tpu.memory_space<vmem>>, %arg7: memref<2x8x2048xf32, #tpu.memory_space<vmem>>) attributes {dimension_semantics = [#tpu.dimension_semantics<parallel>, #tpu.dimension_semantics<parallel>], iteration_bounds = array<i64: 1, 1>, scalar_prefetch = 0 : i64, scratch_operands = 0 : i64, tpu.core_type = #tpu.core_type<tc>, window_params = [{transform_indices = @transform_0, window_bounds = array<i64: 2, 8, 2048>}, {pipeline_mode = #tpu.pipeline_mode<synchronous>, transform_indices = @transform_1, window_bounds = array<i64: 16, 8>}, {pipeline_mode = #tpu.pipeline_mode<synchronous>, transform_indices = @transform_2, window_bounds = array<i64: 16, 1>}, {pipeline_mode = #tpu.pipeline_mode<synchronous>, transform_indices = @transform_3, window_bounds = array<i64: 8, 8>}, {pipeline_mode = #tpu.pipeline_mode<synchronous>, transform_indices = @transform_4, window_bounds = array<i64: 8, 1>}, {transform_indices = @transform_5, window_bounds = array<i64: 2, 8, 2048>}]} {
    %c0 = arith.constant 0 : index
    %c0_0 = arith.constant 0 : index
    %0 = vector.load %arg3[%c0, %c0_0] : memref<16x8xf32, #tpu.memory_space<vmem>>, vector<16x8xf32>
    %c0_1 = arith.constant 0 : index
    %c0_2 = arith.constant 0 : index
    %1 = vector.load %arg4[%c0_1, %c0_2] : memref<16x1xf32, #tpu.memory_space<vmem>>, vector<16x1xf32>
    %c0_3 = arith.constant 0 : index
    %c0_4 = arith.constant 0 : index
    %2 = vector.load %arg5[%c0_3, %c0_4] : memref<8x8xf32, #tpu.memory_space<vmem>>, vector<8x8xf32>
    %c0_5 = arith.constant 0 : index
    %c0_6 = arith.constant 0 : index
    %3 = vector.load %arg6[%c0_5, %c0_6] : memref<8x1xf32, #tpu.memory_space<vmem>>, vector<8x1xf32>
    %c0_7 = arith.constant 0 : index
    %c0_8 = arith.constant 0 : index
    %c0_9 = arith.constant 0 : index
    %4 = vector.load %arg2[%c0_7, %c0_8, %c0_9] : memref<2x8x2048xf32, #tpu.memory_space<vmem>>, vector<1x8x2048xf32>
    %5 = vector.shape_cast %4 : vector<1x8x2048xf32> to vector<8x2048xf32>
    %cst = arith.constant dense<0.000000e+00> : vector<16x2048xf32>
    %6 = tpu.matmul %0, %5, %cst {dimension_numbers = #tpu.dot_dimension_numbers<[1], [0], [0], [1], [0, 0, 1, 1], [], []>} : vector<16x8xf32>, vector<8x2048xf32>, vector<16x2048xf32> -> vector<16x2048xf32>
    %7 = vector.broadcast %1 : vector<16x1xf32> to vector<16x2048xf32>
    %8 = arith.addf %6, %7 : vector<16x2048xf32>
    %9 = vector.extract_strided_slice %8 {offsets = [0, 0], sizes = [8, 2048], strides = [1, 1]} : vector<16x2048xf32> to vector<8x2048xf32>
    %10 = arith.negf %9 : vector<8x2048xf32>
    %11 = math.exp %10 : vector<8x2048xf32>
    %cst_10 = arith.constant 1.000000e+00 : f32
    %12 = vector.broadcast %cst_10 : f32 to vector<8x2048xf32>
    %13 = arith.addf %12, %11 : vector<8x2048xf32>
    %14 = arith.divf %12, %13 : vector<8x2048xf32>
    %15 = vector.extract_strided_slice %8 {offsets = [8, 0], sizes = [8, 2048], strides = [1, 1]} : vector<16x2048xf32> to vector<8x2048xf32>
    %16 = arith.mulf %15, %14 : vector<8x2048xf32>
    %cst_11 = arith.constant dense<0.000000e+00> : vector<8x2048xf32>
    %17 = tpu.matmul %2, %16, %cst_11 {dimension_numbers = #tpu.dot_dimension_numbers<[1], [0], [0], [1], [0, 0, 1, 1], [], []>} : vector<8x8xf32>, vector<8x2048xf32>, vector<8x2048xf32> -> vector<8x2048xf32>
    %18 = vector.broadcast %3 : vector<8x1xf32> to vector<8x2048xf32>
    %19 = arith.addf %17, %18 : vector<8x2048xf32>
    %20 = arith.addf %19, %5 : vector<8x2048xf32>
    %c0_12 = arith.constant 0 : index
    %c0_13 = arith.constant 0 : index
    %c0_14 = arith.constant 0 : index
    %21 = vector.load %arg7[%c0_12, %c0_13, %c0_14] : memref<2x8x2048xf32, #tpu.memory_space<vmem>>, vector<1x8x2048xf32>
    %22 = vector.shape_cast %21 : vector<1x8x2048xf32> to vector<8x2048xf32>
    %23 = vector.shape_cast %20 : vector<8x2048xf32> to vector<1x8x2048xf32>
    tpu.vector_store %arg7[%c0_12, %c0_13, %c0_14], %23 {strides = array<i32>} : memref<2x8x2048xf32, #tpu.memory_space<vmem>>, vector<1x8x2048xf32>,
    %c1 = arith.constant 1 : index
    %c0_15 = arith.constant 0 : index
    %c0_16 = arith.constant 0 : index
    %24 = vector.load %arg2[%c1, %c0_15, %c0_16] : memref<2x8x2048xf32, #tpu.memory_space<vmem>>, vector<1x8x2048xf32>
    %25 = vector.shape_cast %24 : vector<1x8x2048xf32> to vector<8x2048xf32>
    %cst_17 = arith.constant dense<0.000000e+00> : vector<16x2048xf32>
    %26 = tpu.matmul %0, %25, %cst_17 {dimension_numbers = #tpu.dot_dimension_numbers<[1], [0], [0], [1], [0, 0, 1, 1], [], []>} : vector<16x8xf32>, vector<8x2048xf32>, vector<16x2048xf32> -> vector<16x2048xf32>
    %27 = vector.broadcast %1 : vector<16x1xf32> to vector<16x2048xf32>
    %28 = arith.addf %26, %27 : vector<16x2048xf32>
    %29 = vector.extract_strided_slice %28 {offsets = [0, 0], sizes = [8, 2048], strides = [1, 1]} : vector<16x2048xf32> to vector<8x2048xf32>
    %30 = arith.negf %29 : vector<8x2048xf32>
    %31 = math.exp %30 : vector<8x2048xf32>
    %cst_18 = arith.constant 1.000000e+00 : f32
    %32 = vector.broadcast %cst_18 : f32 to vector<8x2048xf32>
    %33 = arith.addf %32, %31 : vector<8x2048xf32>
    %34 = arith.divf %32, %33 : vector<8x2048xf32>
    %35 = vector.extract_strided_slice %28 {offsets = [8, 0], sizes = [8, 2048], strides = [1, 1]} : vector<16x2048xf32> to vector<8x2048xf32>
    %36 = arith.mulf %35, %34 : vector<8x2048xf32>
    %cst_19 = arith.constant dense<0.000000e+00> : vector<8x2048xf32>
    %37 = tpu.matmul %2, %36, %cst_19 {dimension_numbers = #tpu.dot_dimension_numbers<[1], [0], [0], [1], [0, 0, 1, 1], [], []>} : vector<8x8xf32>, vector<8x2048xf32>, vector<8x2048xf32> -> vector<8x2048xf32>
    %38 = vector.broadcast %3 : vector<8x1xf32> to vector<8x2048xf32>
    %39 = arith.addf %37, %38 : vector<8x2048xf32>
    %40 = arith.addf %39, %25 : vector<8x2048xf32>
    %c1_20 = arith.constant 1 : index
    %c0_21 = arith.constant 0 : index
    %c0_22 = arith.constant 0 : index
    %41 = vector.load %arg7[%c1_20, %c0_21, %c0_22] : memref<2x8x2048xf32, #tpu.memory_space<vmem>>, vector<1x8x2048xf32>
    %42 = vector.shape_cast %41 : vector<1x8x2048xf32> to vector<8x2048xf32>
    %43 = vector.shape_cast %40 : vector<8x2048xf32> to vector<1x8x2048xf32>
    tpu.vector_store %arg7[%c1_20, %c0_21, %c0_22], %43 {strides = array<i32>} : memref<2x8x2048xf32, #tpu.memory_space<vmem>>, vector<1x8x2048xf32>,
    return
  }
  func.func @transform_0(%arg0: i32, %arg1: i32) -> (i32, i32, i32) {
    %c0_i32 = arith.constant 0 : i32
    %c0_i32_0 = arith.constant 0 : i32
    return %arg0, %c0_i32, %arg1 : i32, i32, i32
  }
  func.func @transform_1(%arg0: i32, %arg1: i32) -> (i32, i32) {
    %c0_i32 = arith.constant 0 : i32
    %c0_i32_0 = arith.constant 0 : i32
    %c0_i32_1 = arith.constant 0 : i32
    return %c0_i32, %c0_i32_0 : i32, i32
  }
  func.func @transform_2(%arg0: i32, %arg1: i32) -> (i32, i32) {
    %c0_i32 = arith.constant 0 : i32
    %c0_i32_0 = arith.constant 0 : i32
    %c0_i32_1 = arith.constant 0 : i32
    return %c0_i32, %c0_i32_0 : i32, i32
  }
  func.func @transform_3(%arg0: i32, %arg1: i32) -> (i32, i32) {
    %c0_i32 = arith.constant 0 : i32
    %c0_i32_0 = arith.constant 0 : i32
    %c0_i32_1 = arith.constant 0 : i32
    return %c0_i32, %c0_i32_0 : i32, i32
  }
  func.func @transform_4(%arg0: i32, %arg1: i32) -> (i32, i32) {
    %c0_i32 = arith.constant 0 : i32
    %c0_i32_0 = arith.constant 0 : i32
    %c0_i32_1 = arith.constant 0 : i32
    return %c0_i32, %c0_i32_0 : i32, i32
  }
  func.func @transform_5(%arg0: i32, %arg1: i32) -> (i32, i32, i32) {
    %c0_i32 = arith.constant 0 : i32
    %c0_i32_0 = arith.constant 0 : i32
    return %arg0, %c0_i32, %arg1 : i32, i32, i32
  }
}

</mosaic_0001>

<llo_original>
// kernel: simple_nonlocal_block_video.1
$region0: #{simple_nonlocal_block_video.1}
  #allocation0 [shape = 'u32[]', space=smem, size = 0x4, offset = 0x4, fixed_abs, tag = 'smem constant byte address 0x4 - core index']
  #allocation1 [shape = 'u32[72,128]{1,0:T(1,128)}', space=vmem, size = 0x9000, scoped, tag = 'internal scratch']
  %s0 = inlined_call_operand.vmem [shape: f32[2,8,2048], index: 0, kind: input, shape index: {}, may-alias: {0,5}]
  %s1 = inlined_call_operand.vmem [shape: f32[16,8], index: 1, kind: input, shape index: {}]
  %s2 = inlined_call_operand.vmem [shape: f32[16,1], index: 2, kind: input, shape index: {}]
  %s3 = inlined_call_operand.vmem [shape: f32[8,8], index: 3, kind: input, shape index: {}]
  %s4 = inlined_call_operand.vmem [shape: f32[8,1], index: 4, kind: input, shape index: {}]
  %s5 = inlined_call_operand.vmem [shape: f32[2,8,2048], index: 5, kind: output, shape index: {}, may-alias: {0,5}]
  %s6 = sld [smem:[#allocation0]]
  $region30: #{simple_nonlocal_block_video.1} parent=0
    _
  %s8 = ssub.s32 1, %s6
  %s9 = scalar_select 0, %s8, %s6
  // Predicated region
  $region2: #{simple_nonlocal_block_video.1} parent=0 // pred_check
    _
  $region3: #{simple_nonlocal_block_video.1} parent=0 // pred_check_branch
    %11 = sbr.rel (0) target = $region5
  $region4: #{simple_nonlocal_block_video.1} parent=0 // pred_region
    _
  $region5: #{simple_nonlocal_block_video.1} parent=0 // pred_fallthru
    _
  // Predicated region
  $region6: #{simple_nonlocal_block_video.1} parent=0 // pred_check
    _
  $region7: #{simple_nonlocal_block_video.1} parent=0 // pred_check_branch
    %13 = sbr.rel (0) target = $region9
  $region8: #{simple_nonlocal_block_video.1} parent=0 // pred_region
    _
  $region9: #{simple_nonlocal_block_video.1} parent=0 // pred_fallthru
    _
  // Predicated region
  $region10: #{simple_nonlocal_block_video.1} parent=0 // pred_check
    _
  $region11: #{simple_nonlocal_block_video.1} parent=0 // pred_check_branch
    %15 = sbr.rel (0) target = $region13
  $region12: #{simple_nonlocal_block_video.1} parent=0 // pred_region
    _
  $region13: #{simple_nonlocal_block_video.1} parent=0 // pred_fallthru
    _
  // Predicated region
  $region14: #{simple_nonlocal_block_video.1} parent=0 // pred_check
    _
  $region15: #{simple_nonlocal_block_video.1} parent=0 // pred_check_branch
    %17 = sbr.rel (0) target = $region17
  $region16: #{simple_nonlocal_block_video.1} parent=0 // pred_region
    _
  $region17: #{simple_nonlocal_block_video.1} parent=0 // pred_fallthru
    _
  // Predicated region
  $region18: #{simple_nonlocal_block_video.1} parent=0 // pred_check
    _
  $region19: #{simple_nonlocal_block_video.1} parent=0 // pred_check_branch
    %19 = sbr.rel (0) target = $region21
  $region20: #{simple_nonlocal_block_video.1} parent=0 // pred_region
    _
  $region21: #{simple_nonlocal_block_video.1} parent=0 // pred_fallthru
    _
  %v20 = vld [vmem:[%s1] sm:$0xff]
  %v21 = vld [vmem:[%s1 + $0x8] sm:$0xff]
  %v22 = vld [vmem:[%s2] sm:$0xff]
  %v23 = vld [vmem:[%s2 + $0x8] sm:$0xff]
  %v24 = vld [vmem:[%s3] sm:$0xff]
  %v25 = vld [vmem:[%s4] sm:$0xff]
  %v26 = vld [vmem:[%s0] sm:$0xff]
  %v27 = vld [vmem:[%s0 + $0x8] sm:$0xff]
  %v28 = vld [vmem:[%s0 + $0x10] sm:$0xff]
  %v29 = vld [vmem:[%s0 + $0x18] sm:$0xff]
  %v30 = vld [vmem:[%s0 + $0x20] sm:$0xff]
  %v31 = vld [vmem:[%s0 + $0x28] sm:$0xff]
  %v32 = vld [vmem:[%s0 + $0x30] sm:$0xff]
  %v33 = vld [vmem:[%s0 + $0x38] sm:$0xff]
  %v34 = vld [vmem:[%s0 + $0x40] sm:$0xff]
  %v35 = vld [vmem:[%s0 + $0x48] sm:$0xff]
  %v36 = vld [vmem:[%s0 + $0x50] sm:$0xff]
  %v37 = vld [vmem:[%s0 + $0x58] sm:$0xff]
  %v38 = vld [vmem:[%s0 + $0x60] sm:$0xff]
  %v39 = vld [vmem:[%s0 + $0x68] sm:$0xff]
  %v40 = vld [vmem:[%s0 + $0x70] sm:$0xff]
  %v41 = vld [vmem:[%s0 + $0x78] sm:$0xff]
  %43 = vset.pattern.permute.xlu0 0
  %44 = vperm.xlu0 %43, %v22
  %v45 = vpop.permute.xlu0 %44
  %48 = vset.pattern.permute.xlu0 0
  %49 = vperm.xlu0 %48, %v23
  %v50 = vpop.permute.xlu0 %49
  %vm52 = vcmask 64512
  %v54 = vsel %vm52, %v20, 0
  %v57 = vsel %vm52, %v21, 0
  %59 = vmatpush.msra.mxu0 0.0
  %60 = vmatpush.msra.mxu0 0.0
  %61 = vmatpush.msra.mxu0 0.0
  %62 = vmatpush.msra.mxu0 0.0
  %63 = vmatpush.msra.mxu0 0.0
  %64 = vmatpush.msra.mxu0 0.0
  %65 = vmatpush.msra.mxu0 0.0
  %66 = vmatpush.msra.mxu0 0.0
  %67 = vmatpush.msra.mxu0 0.0
  %68 = vmatpush.msra.mxu0 0.0
  %69 = vmatpush.msra.mxu0 0.0
  %70 = vmatpush.msra.mxu0 0.0
  %71 = vmatpush.msra.mxu0 0.0
  %72 = vmatpush.msra.mxu0 0.0
  %73 = vmatpush.msra.mxu0 0.0
  %74 = vmatpush.msra.mxu0 %v26
  %75 = vmatmul.f32.gmra.mxu0 %v54
  %v76 = vpop.f32.mrf.mxu0
  %v77 = vadd.f32 %v45, %v76
  %78 = vmatmul.f32.gmra.mxu0 %v57
  %v79 = vpop.f32.mrf.mxu0
  %v80 = vadd.f32 %v50, %v79
  %81 = vdwg.mxu0
  %82 = vmatpush.msra.mxu0 0.0
  %83 = vmatpush.msra.mxu0 0.0
  %84 = vmatpush.msra.mxu0 0.0
  %85 = vmatpush.msra.mxu0 0.0
  %86 = vmatpush.msra.mxu0 0.0
  %87 = vmatpush.msra.mxu0 0.0
  %88 = vmatpush.msra.mxu0 0.0
  %89 = vmatpush.msra.mxu0 0.0
  %90 = vmatpush.msra.mxu0 0.0
  %91 = vmatpush.msra.mxu0 0.0
  %92 = vmatpush.msra.mxu0 0.0
  %93 = vmatpush.msra.mxu0 0.0
  %94 = vmatpush.msra.mxu0 0.0
  %95 = vmatpush.msra.mxu0 0.0
  %96 = vmatpush.msra.mxu0 0.0
  %97 = vmatpush.msra.mxu0 %v27
  %98 = vmatmul.f32.gmra.mxu0 %v54
  %v99 = vpop.f32.mrf.mxu0
  %v100 = vadd.f32 %v45, %v99
  %101 = vmatmul.f32.gmra.mxu0 %v57
  %v102 = vpop.f32.mrf.mxu0
  %v103 = vadd.f32 %v50, %v102
  %104 = vdwg.mxu0
  %105 = vmatpush.msra.mxu0 0.0
  %106 = vmatpush.msra.mxu0 0.0
  %107 = vmatpush.msra.mxu0 0.0
  %108 = vmatpush.msra.mxu0 0.0
  %109 = vmatpush.msra.mxu0 0.0
  %110 = vmatpush.msra.mxu0 0.0
  %111 = vmatpush.msra.mxu0 0.0
  %112 = vmatpush.msra.mxu0 0.0
  %113 = vmatpush.msra.mxu0 0.0
  %114 = vmatpush.msra.mxu0 0.0
  %115 = vmatpush.msra.mxu0 0.0
  %116 = vmatpush.msra.mxu0 0.0
  %117 = vmatpush.msra.mxu0 0.0
  %118 = vmatpush.msra.mxu0 0.0
  %119 = vmatpush.msra.mxu0 0.0
  %120 = vmatpush.msra.mxu0 %v28
  %121 = vmatmul.f32.gmra.mxu0 %v54
  %v122 = vpop.f32.mrf.mxu0
  %v123 = vadd.f32 %v45, %v122
  %124 = vmatmul.f32.gmra.mxu0 %v57
  %v125 = vpop.f32.mrf.mxu0
  %v126 = vadd.f32 %v50, %v125
  %127 = vdwg.mxu0
  %128 = vmatpush.msra.mxu0 0.0
  %129 = vmatpush.msra.mxu0 0.0
  %130 = vmatpush.msra.mxu0 0.0
  %131 = vmatpush.msra.mxu0 0.0
  %132 = vmatpush.msra.mxu0 0.0
  %133 = vmatpush.msra.mxu0 0.0
  %134 = vmatpush.msra.mxu0 0.0
  %135 = vmatpush.msra.mxu0 0.0
  %136 = vmatpush.msra.mxu0 0.0
  %137 = vmatpush.msra.mxu0 0.0
  %138 = vmatpush.msra.mxu0 0.0
  %139 = vmatpush.msra.mxu0 0.0
  %140 = vmatpush.msra.mxu0 0.0
  %141 = vmatpush.msra.mxu0 0.0
  %142 = vmatpush.msra.mxu0 0.0
  %143 = vmatpush.msra.mxu0 %v29
  %144 = vmatmul.f32.gmra.mxu0 %v54
  %v145 = vpop.f32.mrf.mxu0
  %v146 = vadd.f32 %v45, %v145
  %147 = vmatmul.f32.gmra.mxu0 %v57
  %v148 = vpop.f32.mrf.mxu0
  %v149 = vadd.f32 %v50, %v148
  %150 = vdwg.mxu0
  %151 = vmatpush.msra.mxu0 0.0
  %152 = vmatpush.msra.mxu0 0.0
  %153 = vmatpush.msra.mxu0 0.0
  %154 = vmatpush.msra.mxu0 0.0
  %155 = vmatpush.msra.mxu0 0.0
  %156 = vmatpush.msra.mxu0 0.0
  %157 = vmatpush.msra.mxu0 0.0
  %158 = vmatpush.msra.mxu0 0.0
  %159 = vmatpush.msra.mxu0 0.0
  %160 = vmatpush.msra.mxu0 0.0
  %161 = vmatpush.msra.mxu0 0.0
  %162 = vmatpush.msra.mxu0 0.0
  %163 = vmatpush.msra.mxu0 0.0
  %164 = vmatpush.msra.mxu0 0.0
  %165 = vmatpush.msra.mxu0 0.0
  %166 = vmatpush.msra.mxu0 %v30
  %167 = vmatmul.f32.gmra.mxu0 %v54
  %v168 = vpop.f32.mrf.mxu0
  %v169 = vadd.f32 %v45, %v168
  %170 = vmatmul.f32.gmra.mxu0 %v57
  %v171 = vpop.f32.mrf.mxu0
  %v172 = vadd.f32 %v50, %v171
  %173 = vdwg.mxu0
  %174 = vmatpush.msra.mxu0 0.0
  %175 = vmatpush.msra.mxu0 0.0
  %176 = vmatpush.msra.mxu0 0.0
  %177 = vmatpush.msra.mxu0 0.0
  %178 = vmatpush.msra.mxu0 0.0
  %179 = vmatpush.msra.mxu0 0.0
  %180 = vmatpush.msra.mxu0 0.0
  %181 = vmatpush.msra.mxu0 0.0
  %182 = vmatpush.msra.mxu0 0.0
  %183 = vmatpush.msra.mxu0 0.0
  %184 = vmatpush.msra.mxu0 0.0
  %185 = vmatpush.msra.mxu0 0.0
  %186 = vmatpush.msra.mxu0 0.0
  %187 = vmatpush.msra.mxu0 0.0
  %188 = vmatpush.msra.mxu0 0.0
  %189 = vmatpush.msra.mxu0 %v31
  %190 = vmatmul.f32.gmra.mxu0 %v54
  %v191 = vpop.f32.mrf.mxu0
  %v192 = vadd.f32 %v45, %v191
  %193 = vmatmul.f32.gmra.mxu0 %v57
  %v194 = vpop.f32.mrf.mxu0
  %v195 = vadd.f32 %v50, %v194
  %196 = vdwg.mxu0
  %197 = vmatpush.msra.mxu0 0.0
  %198 = vmatpush.msra.mxu0 0.0
  %199 = vmatpush.msra.mxu0 0.0
  %200 = vmatpush.msra.mxu0 0.0
  %201 = vmatpush.msra.mxu0 0.0
  %202 = vmatpush.msra.mxu0 0.0
  %203 = vmatpush.msra.mxu0 0.0
  %204 = vmatpush.msra.mxu0 0.0
  %205 = vmatpush.msra.mxu0 0.0
  %206 = vmatpush.msra.mxu0 0.0
  %207 = vmatpush.msra.mxu0 0.0
  %208 = vmatpush.msra.mxu0 0.0
  %209 = vmatpush.msra.mxu0 0.0
  %210 = vmatpush.msra.mxu0 0.0
  %211 = vmatpush.msra.mxu0 0.0
  %212 = vmatpush.msra.mxu0 %v32
  %213 = vmatmul.f32.gmra.mxu0 %v54
  %v214 = vpop.f32.mrf.mxu0
  %v215 = vadd.f32 %v45, %v214
  %216 = vmatmul.f32.gmra.mxu0 %v57
  %v217 = vpop.f32.mrf.mxu0
  %v218 = vadd.f32 %v50, %v217
  %219 = vdwg.mxu0
  %220 = vmatpush.msra.mxu0 0.0
  %221 = vmatpush.msra.mxu0 0.0
  %222 = vmatpush.msra.mxu0 0.0
  %223 = vmatpush.msra.mxu0 0.0
  %224 = vmatpush.msra.mxu0 0.0
  %225 = vmatpush.msra.mxu0 0.0
  %226 = vmatpush.msra.mxu0 0.0
  %227 = vmatpush.msra.mxu0 0.0
  %228 = vmatpush.msra.mxu0 0.0
  %229 = vmatpush.msra.mxu0 0.0
  %230 = vmatpush.msra.mxu0 0.0
  %231 = vmatpush.msra.mxu0 0.0
  %232 = vmatpush.msra.mxu0 0.0
  %233 = vmatpush.msra.mxu0 0.0
  %234 = vmatpush.msra.mxu0 0.0
  %235 = vmatpush.msra.mxu0 %v33
  %236 = vmatmul.f32.gmra.mxu0 %v54
  %v237 = vpop.f32.mrf.mxu0
  %v238 = vadd.f32 %v45, %v237
  %239 = vmatmul.f32.gmra.mxu0 %v57
  %v240 = vpop.f32.mrf.mxu0
  %v241 = vadd.f32 %v50, %v240
  %242 = vdwg.mxu0
  %243 = vmatpush.msra.mxu0 0.0
  %244 = vmatpush.msra.mxu0 0.0
  %245 = vmatpush.msra.mxu0 0.0
  %246 = vmatpush.msra.mxu0 0.0
  %247 = vmatpush.msra.mxu0 0.0
  %248 = vmatpush.msra.mxu0 0.0
  %249 = vmatpush.msra.mxu0 0.0
  %250 = vmatpush.msra.mxu0 0.0
  %251 = vmatpush.msra.mxu0 0.0
  %252 = vmatpush.msra.mxu0 0.0
  %253 = vmatpush.msra.mxu0 0.0
  %254 = vmatpush.msra.mxu0 0.0
  %255 = vmatpush.msra.mxu0 0.0
  %256 = vmatpush.msra.mxu0 0.0
  %257 = vmatpush.msra.mxu0 0.0
  %258 = vmatpush.msra.mxu0 %v34
  %259 = vmatmul.f32.gmra.mxu0 %v54
  %v260 = vpop.f32.mrf.mxu0
  %v261 = vadd.f32 %v45, %v260
  %262 = vmatmul.f32.gmra.mxu0 %v57
  %v263 = vpop.f32.mrf.mxu0
  %v264 = vadd.f32 %v50, %v263
  %265 = vdwg.mxu0
  %266 = vmatpush.msra.mxu0 0.0
  %267 = vmatpush.msra.mxu0 0.0
  %268 = vmatpush.msra.mxu0 0.0
  %269 = vmatpush.msra.mxu0 0.0
  %270 = vmatpush.msra.mxu0 0.0
  %271 = vmatpush.msra.mxu0 0.0
  %272 = vmatpush.msra.mxu0 0.0
  %273 = vmatpush.msra.mxu0 0.0
  %274 = vmatpush.msra.mxu0 0.0
  %275 = vmatpush.msra.mxu0 0.0
  %276 = vmatpush.msra.mxu0 0.0
  %277 = vmatpush.msra.mxu0 0.0
  %278 = vmatpush.msra.mxu0 0.0
  %279 = vmatpush.msra.mxu0 0.0
  %280 = vmatpush.msra.mxu0 0.0
  %281 = vmatpush.msra.mxu0 %v35
  %282 = vmatmul.f32.gmra.mxu0 %v54
  %v283 = vpop.f32.mrf.mxu0
  %v284 = vadd.f32 %v45, %v283
  %285 = vmatmul.f32.gmra.mxu0 %v57
  %v286 = vpop.f32.mrf.mxu0
  %v287 = vadd.f32 %v50, %v286
  %288 = vdwg.mxu0
  %289 = vmatpush.msra.mxu0 0.0
  %290 = vmatpush.msra.mxu0 0.0
  %291 = vmatpush.msra.mxu0 0.0
  %292 = vmatpush.msra.mxu0 0.0
  %293 = vmatpush.msra.mxu0 0.0
  %294 = vmatpush.msra.mxu0 0.0
  %295 = vmatpush.msra.mxu0 0.0
  %296 = vmatpush.msra.mxu0 0.0
  %297 = vmatpush.msra.mxu0 0.0
  %298 = vmatpush.msra.mxu0 0.0
  %299 = vmatpush.msra.mxu0 0.0
  %300 = vmatpush.msra.mxu0 0.0
  %301 = vmatpush.msra.mxu0 0.0
  %302 = vmatpush.msra.mxu0 0.0
  %303 = vmatpush.msra.mxu0 0.0
  %304 = vmatpush.msra.mxu0 %v36
  %305 = vmatmul.f32.gmra.mxu0 %v54
  %v306 = vpop.f32.mrf.mxu0
  %v307 = vadd.f32 %v45, %v306
  %308 = vmatmul.f32.gmra.mxu0 %v57
  %v309 = vpop.f32.mrf.mxu0
  %v310 = vadd.f32 %v50, %v309
  %311 = vdwg.mxu0
  %312 = vmatpush.msra.mxu0 0.0
  %313 = vmatpush.msra.mxu0 0.0
  %314 = vmatpush.msra.mxu0 0.0
  %315 = vmatpush.msra.mxu0 0.0
  %316 = vmatpush.msra.mxu0 0.0
  %317 = vmatpush.msra.mxu0 0.0
  %318 = vmatpush.msra.mxu0 0.0
  %319 = vmatpush.msra.mxu0 0.0
  %320 = vmatpush.msra.mxu0 0.0
  %321 = vmatpush.msra.mxu0 0.0
  %322 = vmatpush.msra.mxu0 0.0
  %323 = vmatpush.msra.mxu0 0.0
  %324 = vmatpush.msra.mxu0 0.0
  %325 = vmatpush.msra.mxu0 0.0
  %326 = vmatpush.msra.mxu0 0.0
  %327 = vmatpush.msra.mxu0 %v37
  %328 = vmatmul.f32.gmra.mxu0 %v54
  %v329 = vpop.f32.mrf.mxu0
  %v330 = vadd.f32 %v45, %v329
  %331 = vmatmul.f32.gmra.mxu0 %v57
  %v332 = vpop.f32.mrf.mxu0
  %v333 = vadd.f32 %v50, %v332
  %334 = vdwg.mxu0
  %335 = vmatpush.msra.mxu0 0.0
  %336 = vmatpush.msra.mxu0 0.0
  %337 = vmatpush.msra.mxu0 0.0
  %338 = vmatpush.msra.mxu0 0.0
  %339 = vmatpush.msra.mxu0 0.0
  %340 = vmatpush.msra.mxu0 0.0
  %341 = vmatpush.msra.mxu0 0.0
  %342 = vmatpush.msra.mxu0 0.0
  %343 = vmatpush.msra.mxu0 0.0
  %344 = vmatpush.msra.mxu0 0.0
  %345 = vmatpush.msra.mxu0 0.0
  %346 = vmatpush.msra.mxu0 0.0
  %347 = vmatpush.msra.mxu0 0.0
  %348 = vmatpush.msra.mxu0 0.0
  %349 = vmatpush.msra.mxu0 0.0
  %350 = vmatpush.msra.mxu0 %v38
  %351 = vmatmul.f32.gmra.mxu0 %v54
  %v352 = vpop.f32.mrf.mxu0
  %v353 = vadd.f32 %v45, %v352
  %354 = vmatmul.f32.gmra.mxu0 %v57
  %v355 = vpop.f32.mrf.mxu0
  %v356 = vadd.f32 %v50, %v355
  %357 = vdwg.mxu0
  %358 = vmatpush.msra.mxu0 0.0
  %359 = vmatpush.msra.mxu0 0.0
  %360 = vmatpush.msra.mxu0 0.0
  %361 = vmatpush.msra.mxu0 0.0
  %362 = vmatpush.msra.mxu0 0.0
  %363 = vmatpush.msra.mxu0 0.0
  %364 = vmatpush.msra.mxu0 0.0
  %365 = vmatpush.msra.mxu0 0.0
  %366 = vmatpush.msra.mxu0 0.0
  %367 = vmatpush.msra.mxu0 0.0
  %368 = vmatpush.msra.mxu0 0.0
  %369 = vmatpush.msra.mxu0 0.0
  %370 = vmatpush.msra.mxu0 0.0
  %371 = vmatpush.msra.mxu0 0.0
  %372 = vmatpush.msra.mxu0 0.0
  %373 = vmatpush.msra.mxu0 %v39
  %374 = vmatmul.f32.gmra.mxu0 %v54
  %v375 = vpop.f32.mrf.mxu0
  %v376 = vadd.f32 %v45, %v375
  %377 = vmatmul.f32.gmra.mxu0 %v57
  %v378 = vpop.f32.mrf.mxu0
  %v379 = vadd.f32 %v50, %v378
  %380 = vdwg.mxu0
  %381 = vmatpush.msra.mxu0 0.0
  %382 = vmatpush.msra.mxu0 0.0
  %383 = vmatpush.msra.mxu0 0.0
  %384 = vmatpush.msra.mxu0 0.0
  %385 = vmatpush.msra.mxu0 0.0
  %386 = vmatpush.msra.mxu0 0.0
  %387 = vmatpush.msra.mxu0 0.0
  %388 = vmatpush.msra.mxu0 0.0
  %389 = vmatpush.msra.mxu0 0.0
  %390 = vmatpush.msra.mxu0 0.0
  %391 = vmatpush.msra.mxu0 0.0
  %392 = vmatpush.msra.mxu0 0.0
  %393 = vmatpush.msra.mxu0 0.0
  %394 = vmatpush.msra.mxu0 0.0
  %395 = vmatpush.msra.mxu0 0.0
  %396 = vmatpush.msra.mxu0 %v40
  %397 = vmatmul.f32.gmra.mxu0 %v54
  %v398 = vpop.f32.mrf.mxu0
  %v399 = vadd.f32 %v45, %v398
  %400 = vmatmul.f32.gmra.mxu0 %v57
  %v401 = vpop.f32.mrf.mxu0
  %v402 = vadd.f32 %v50, %v401
  %403 = vdwg.mxu0
  %404 = vmatpush.msra.mxu0 0.0
  %405 = vmatpush.msra.mxu0 0.0
  %406 = vmatpush.msra.mxu0 0.0
  %407 = vmatpush.msra.mxu0 0.0
  %408 = vmatpush.msra.mxu0 0.0
  %409 = vmatpush.msra.mxu0 0.0
  %410 = vmatpush.msra.mxu0 0.0
  %411 = vmatpush.msra.mxu0 0.0
  %412 = vmatpush.msra.mxu0 0.0
  %413 = vmatpush.msra.mxu0 0.0
  %414 = vmatpush.msra.mxu0 0.0
  %415 = vmatpush.msra.mxu0 0.0
  %416 = vmatpush.msra.mxu0 0.0
  %417 = vmatpush.msra.mxu0 0.0
  %418 = vmatpush.msra.mxu0 0.0
  %419 = vmatpush.msra.mxu0 %v41
  %420 = vmatmul.f32.gmra.mxu0 %v54
  %v421 = vpop.f32.mrf.mxu0
  %v422 = vadd.f32 %v45, %v421
  %423 = vmatmul.f32.gmra.mxu0 %v57
  %v424 = vpop.f32.mrf.mxu0
  %v425 = vadd.f32 %v50, %v424
  %426 = vdwg.mxu0
  %v427 = vxor.u32 %v77, 2147483648
  %v428 = vxor.u32 %v100, 2147483648
  %v429 = vxor.u32 %v123, 2147483648
  %v430 = vxor.u32 %v146, 2147483648
  %v431 = vxor.u32 %v169, 2147483648
  %v432 = vxor.u32 %v192, 2147483648
  %v433 = vxor.u32 %v215, 2147483648
  %v434 = vxor.u32 %v238, 2147483648
  %v435 = vxor.u32 %v261, 2147483648
  %v436 = vxor.u32 %v284, 2147483648
  %v437 = vxor.u32 %v307, 2147483648
  %v438 = vxor.u32 %v330, 2147483648
  %v439 = vxor.u32 %v353, 2147483648
  %v440 = vxor.u32 %v376, 2147483648
  %v441 = vxor.u32 %v399, 2147483648
  %v442 = vxor.u32 %v422, 2147483648
  %v443 = vmul.f32 %v427, 1.442695
  %v444 = vpow.pop %v443
  %v445 = vmul.f32 %v428, 1.442695
  %v446 = vpow.pop %v445
  %v447 = vmul.f32 %v429, 1.442695
  %v448 = vpow.pop %v447
  %v449 = vmul.f32 %v430, 1.442695
  %v450 = vpow.pop %v449
  %v451 = vmul.f32 %v431, 1.442695
  %v452 = vpow.pop %v451
  %v453 = vmul.f32 %v432, 1.442695
  %v454 = vpow.pop %v453
  %v455 = vmul.f32 %v433, 1.442695
  %v456 = vpow.pop %v455
  %v457 = vmul.f32 %v434, 1.442695
  %v458 = vpow.pop %v457
  %v459 = vmul.f32 %v435, 1.442695
  %v460 = vpow.pop %v459
  %v461 = vmul.f32 %v436, 1.442695
  %v462 = vpow.pop %v461
  %v463 = vmul.f32 %v437, 1.442695
  %v464 = vpow.pop %v463
  %v465 = vmul.f32 %v438, 1.442695
  %v466 = vpow.pop %v465
  %v467 = vmul.f32 %v439, 1.442695
  %v468 = vpow.pop %v467
  %v469 = vmul.f32 %v440, 1.442695
  %v470 = vpow.pop %v469
  %v471 = vmul.f32 %v441, 1.442695
  %v472 = vpow.pop %v471
  %v473 = vmul.f32 %v442, 1.442695
  %v474 = vpow.pop %v473
  %v475 = vadd.f32 %v444, 1.0
  %v476 = vadd.f32 %v446, 1.0
  %v477 = vadd.f32 %v448, 1.0
  %v478 = vadd.f32 %v450, 1.0
  %v479 = vadd.f32 %v452, 1.0
  %v480 = vadd.f32 %v454, 1.0
  %v481 = vadd.f32 %v456, 1.0
  %v482 = vadd.f32 %v458, 1.0
  %v483 = vadd.f32 %v460, 1.0
  %v484 = vadd.f32 %v462, 1.0
  %v485 = vadd.f32 %v464, 1.0
  %v486 = vadd.f32 %v466, 1.0
  %v487 = vadd.f32 %v468, 1.0
  %v488 = vadd.f32 %v470, 1.0
  %v489 = vadd.f32 %v472, 1.0
  %v490 = vadd.f32 %v474, 1.0
  %v491 = vrcp.pop %v475
  %v492 = vmul.f32 %v475, %v491
  %v493 = vsub.f32 1.0, %v492
  %v494 = vmul.f32 %v491, %v493
  %v495 = vadd.f32 %v491, %v494
  %vm496 = vweird.f32 %v475
  %vm497 = vweird.f32 %v491
  %vm498 = vmor %vm496, %vm497
  %v499 = vsel %vm498, %v491, %v495
  %v500 = vand.u32 2147483647, %v475
  %vm501 = vcmp.eq.f32.partialorder %v500, 8.507059e+37
  %v502 = vand.u32 %v475, 2147483648
  %v503 = vor.u32 1.1754944e-38, %v502
  %v504 = vsel %vm501, %v503, %v499
  %v505 = vmul.f32 1.0, %v504
  %v506 = vrcp.pop %v476
  %v507 = vmul.f32 %v476, %v506
  %v508 = vsub.f32 1.0, %v507
  %v509 = vmul.f32 %v506, %v508
  %v510 = vadd.f32 %v506, %v509
  %vm511 = vweird.f32 %v476
  %vm512 = vweird.f32 %v506
  %vm513 = vmor %vm511, %vm512
  %v514 = vsel %vm513, %v506, %v510
  %v515 = vand.u32 2147483647, %v476
  %vm516 = vcmp.eq.f32.partialorder %v515, 8.507059e+37
  %v517 = vand.u32 %v476, 2147483648
  %v518 = vor.u32 1.1754944e-38, %v517
  %v519 = vsel %vm516, %v518, %v514
  %v520 = vmul.f32 1.0, %v519
  %v521 = vrcp.pop %v477
  %v522 = vmul.f32 %v477, %v521
  %v523 = vsub.f32 1.0, %v522
  %v524 = vmul.f32 %v521, %v523
  %v525 = vadd.f32 %v521, %v524
  %vm526 = vweird.f32 %v477
  %vm527 = vweird.f32 %v521
  %vm528 = vmor %vm526, %vm527
  %v529 = vsel %vm528, %v521, %v525
  %v530 = vand.u32 2147483647, %v477
  %vm531 = vcmp.eq.f32.partialorder %v530, 8.507059e+37
  %v532 = vand.u32 %v477, 2147483648
  %v533 = vor.u32 1.1754944e-38, %v532
  %v534 = vsel %vm531, %v533, %v529
  %v535 = vmul.f32 1.0, %v534
  %v536 = vrcp.pop %v478
  %v537 = vmul.f32 %v478, %v536
  %v538 = vsub.f32 1.0, %v537
  %v539 = vmul.f32 %v536, %v538
  %v540 = vadd.f32 %v536, %v539
  %vm541 = vweird.f32 %v478
  %vm542 = vweird.f32 %v536
  %vm543 = vmor %vm541, %vm542
  %v544 = vsel %vm543, %v536, %v540
  %v545 = vand.u32 2147483647, %v478
  %vm546 = vcmp.eq.f32.partialorder %v545, 8.507059e+37
  %v547 = vand.u32 %v478, 2147483648
  %v548 = vor.u32 1.1754944e-38, %v547
  %v549 = vsel %vm546, %v548, %v544
  %v550 = vmul.f32 1.0, %v549
  %v551 = vrcp.pop %v479
  %v552 = vmul.f32 %v479, %v551
  %v553 = vsub.f32 1.0, %v552
  %v554 = vmul.f32 %v551, %v553
  %v555 = vadd.f32 %v551, %v554
  %vm556 = vweird.f32 %v479
  %vm557 = vweird.f32 %v551
  %vm558 = vmor %vm556, %vm557
  %v559 = vsel %vm558, %v551, %v555
  %v560 = vand.u32 2147483647, %v479
  %vm561 = vcmp.eq.f32.partialorder %v560, 8.507059e+37
  %v562 = vand.u32 %v479, 2147483648
  %v563 = vor.u32 1.1754944e-38, %v562
  %v564 = vsel %vm561, %v563, %v559
  %v565 = vmul.f32 1.0, %v564
  %v566 = vrcp.pop %v480
  %v567 = vmul.f32 %v480, %v566
  %v568 = vsub.f32 1.0, %v567
  %v569 = vmul.f32 %v566, %v568
  %v570 = vadd.f32 %v566, %v569
  %vm571 = vweird.f32 %v480
  %vm572 = vweird.f32 %v566
  %vm573 = vmor %vm571, %vm572
  %v574 = vsel %vm573, %v566, %v570
  %v575 = vand.u32 2147483647, %v480
  %vm576 = vcmp.eq.f32.partialorder %v575, 8.507059e+37
  %v577 = vand.u32 %v480, 2147483648
  %v578 = vor.u32 1.1754944e-38, %v577
  %v579 = vsel %vm576, %v578, %v574
  %v580 = vmul.f32 1.0, %v579
  %v581 = vrcp.pop %v481
  %v582 = vmul.f32 %v481, %v581
  %v583 = vsub.f32 1.0, %v582
  %v584 = vmul.f32 %v581, %v583
  %v585 = vadd.f32 %v581, %v584
  %vm586 = vweird.f32 %v481
  %vm587 = vweird.f32 %v581
  %vm588 = vmor %vm586, %vm587
  %v589 = vsel %vm588, %v581, %v585
  %v590 = vand.u32 2147483647, %v481
  %vm591 = vcmp.eq.f32.partialorder %v590, 8.507059e+37
  %v592 = vand.u32 %v481, 2147483648
  %v593 = vor.u32 1.1754944e-38, %v592
  %v594 = vsel %vm591, %v593, %v589
  %v595 = vmul.f32 1.0, %v594
  %v596 = vrcp.pop %v482
  %v597 = vmul.f32 %v482, %v596
  %v598 = vsub.f32 1.0, %v597
  %v599 = vmul.f32 %v596, %v598
  %v600 = vadd.f32 %v596, %v599
  %vm601 = vweird.f32 %v482
  %vm602 = vweird.f32 %v596
  %vm603 = vmor %vm601, %vm602
  %v604 = vsel %vm603, %v596, %v600
  %v605 = vand.u32 2147483647, %v482
  %vm606 = vcmp.eq.f32.partialorder %v605, 8.507059e+37
  %v607 = vand.u32 %v482, 2147483648
  %v608 = vor.u32 1.1754944e-38, %v607
  %v609 = vsel %vm606, %v608, %v604
  %v610 = vmul.f32 1.0, %v609
  %v611 = vrcp.pop %v483
  %v612 = vmul.f32 %v483, %v611
  %v613 = vsub.f32 1.0, %v612
  %v614 = vmul.f32 %v611, %v613
  %v615 = vadd.f32 %v611, %v614
  %vm616 = vweird.f32 %v483
  %vm617 = vweird.f32 %v611
  %vm618 = vmor %vm616, %vm617
  %v619 = vsel %vm618, %v611, %v615
  %v620 = vand.u32 2147483647, %v483
  %vm621 = vcmp.eq.f32.partialorder %v620, 8.507059e+37
  %v622 = vand.u32 %v483, 2147483648
  %v623 = vor.u32 1.1754944e-38, %v622
  %v624 = vsel %vm621, %v623, %v619
  %v625 = vmul.f32 1.0, %v624
  %v626 = vrcp.pop %v484
  %v627 = vmul.f32 %v484, %v626
  %v628 = vsub.f32 1.0, %v627
  %v629 = vmul.f32 %v626, %v628
  %v630 = vadd.f32 %v626, %v629
  %vm631 = vweird.f32 %v484
  %vm632 = vweird.f32 %v626
  %vm633 = vmor %vm631, %vm632
  %v634 = vsel %vm633, %v626, %v630
  %v635 = vand.u32 2147483647, %v484
  %vm636 = vcmp.eq.f32.partialorder %v635, 8.507059e+37
  %v637 = vand.u32 %v484, 2147483648
  %v638 = vor.u32 1.1754944e-38, %v637
  %v639 = vsel %vm636, %v638, %v634
  %v640 = vmul.f32 1.0, %v639
  %v641 = vrcp.pop %v485
  %v642 = vmul.f32 %v485, %v641
  %v643 = vsub.f32 1.0, %v642
  %v644 = vmul.f32 %v641, %v643
  %v645 = vadd.f32 %v641, %v644
  %vm646 = vweird.f32 %v485
  %vm647 = vweird.f32 %v641
  %vm648 = vmor %vm646, %vm647
  %v649 = vsel %vm648, %v641, %v645
  %v650 = vand.u32 2147483647, %v485
  %vm651 = vcmp.eq.f32.partialorder %v650, 8.507059e+37
  %v652 = vand.u32 %v485, 2147483648
  %v653 = vor.u32 1.1754944e-38, %v652
  %v654 = vsel %vm651, %v653, %v649
  %v655 = vmul.f32 1.0, %v654
  %v656 = vrcp.pop %v486
  %v657 = vmul.f32 %v486, %v656
  %v658 = vsub.f32 1.0, %v657
  %v659 = vmul.f32 %v656, %v658
  %v660 = vadd.f32 %v656, %v659
  %vm661 = vweird.f32 %v486
  %vm662 = vweird.f32 %v656
  %vm663 = vmor %vm661, %vm662
  %v664 = vsel %vm663, %v656, %v660
  %v665 = vand.u32 2147483647, %v486
  %vm666 = vcmp.eq.f32.partialorder %v665, 8.507059e+37
  %v667 = vand.u32 %v486, 2147483648
  %v668 = vor.u32 1.1754944e-38, %v667
  %v669 = vsel %vm666, %v668, %v664
  %v670 = vmul.f32 1.0, %v669
  %v671 = vrcp.pop %v487
  %v672 = vmul.f32 %v487, %v671
  %v673 = vsub.f32 1.0, %v672
  %v674 = vmul.f32 %v671, %v673
  %v675 = vadd.f32 %v671, %v674
  %vm676 = vweird.f32 %v487
  %vm677 = vweird.f32 %v671
  %vm678 = vmor %vm676, %vm677
  %v679 = vsel %vm678, %v671, %v675
  %v680 = vand.u32 2147483647, %v487
  %vm681 = vcmp.eq.f32.partialorder %v680, 8.507059e+37
  %v682 = vand.u32 %v487, 2147483648
  %v683 = vor.u32 1.1754944e-38, %v682
  %v684 = vsel %vm681, %v683, %v679
  %v685 = vmul.f32 1.0, %v684
  %v686 = vrcp.pop %v488
  %v687 = vmul.f32 %v488, %v686
  %v688 = vsub.f32 1.0, %v687
  %v689 = vmul.f32 %v686, %v688
  %v690 = vadd.f32 %v686, %v689
  %vm691 = vweird.f32 %v488
  %vm692 = vweird.f32 %v686
  %vm693 = vmor %vm691, %vm692
  %v694 = vsel %vm693, %v686, %v690
  %v695 = vand.u32 2147483647, %v488
  %vm696 = vcmp.eq.f32.partialorder %v695, 8.507059e+37
  %v697 = vand.u32 %v488, 2147483648
  %v698 = vor.u32 1.1754944e-38, %v697
  %v699 = vsel %vm696, %v698, %v694
  %v700 = vmul.f32 1.0, %v699
  %v701 = vrcp.pop %v489
  %v702 = vmul.f32 %v489, %v701
  %v703 = vsub.f32 1.0, %v702
  %v704 = vmul.f32 %v701, %v703
  %v705 = vadd.f32 %v701, %v704
  %vm706 = vweird.f32 %v489
  %vm707 = vweird.f32 %v701
  %vm708 = vmor %vm706, %vm707
  %v709 = vsel %vm708, %v701, %v705
  %v710 = vand.u32 2147483647, %v489
  %vm711 = vcmp.eq.f32.partialorder %v710, 8.507059e+37
  %v712 = vand.u32 %v489, 2147483648
  %v713 = vor.u32 1.1754944e-38, %v712
  %v714 = vsel %vm711, %v713, %v709
  %v715 = vmul.f32 1.0, %v714
  %v716 = vrcp.pop %v490
  %v717 = vmul.f32 %v490, %v716
  %v718 = vsub.f32 1.0, %v717
  %v719 = vmul.f32 %v716, %v718
  %v720 = vadd.f32 %v716, %v719
  %vm721 = vweird.f32 %v490
  %vm722 = vweird.f32 %v716
  %vm723 = vmor %vm721, %vm722
  %v724 = vsel %vm723, %v716, %v720
  %v725 = vand.u32 2147483647, %v490
  %vm726 = vcmp.eq.f32.partialorder %v725, 8.507059e+37
  %v727 = vand.u32 %v490, 2147483648
  %v728 = vor.u32 1.1754944e-38, %v727
  %v729 = vsel %vm726, %v728, %v724
  %v730 = vmul.f32 1.0, %v729
  %v731 = vmul.f32 %v80, %v505
  %v732 = vmul.f32 %v103, %v520
  %v733 = vmul.f32 %v126, %v535
  %v734 = vmul.f32 %v149, %v550
  %v735 = vmul.f32 %v172, %v565
  %v736 = vmul.f32 %v195, %v580
  %v737 = vmul.f32 %v218, %v595
  %v738 = vmul.f32 %v241, %v610
  %v739 = vmul.f32 %v264, %v625
  %v740 = vmul.f32 %v287, %v640
  %v741 = vmul.f32 %v310, %v655
  %v742 = vmul.f32 %v333, %v670
  %v743 = vmul.f32 %v356, %v685
  %v744 = vmul.f32 %v379, %v700
  %v745 = vmul.f32 %v402, %v715
  %v746 = vmul.f32 %v425, %v730
  %748 = vset.pattern.permute.xlu0 0
  %749 = vperm.xlu0 %748, %v25
  %v750 = vpop.permute.xlu0 %749
  %v753 = vsel %vm52, %v24, 0
  %755 = vmatpush.msra.mxu0 0.0
  %756 = vmatpush.msra.mxu0 0.0
  %757 = vmatpush.msra.mxu0 0.0
  %758 = vmatpush.msra.mxu0 0.0
  %759 = vmatpush.msra.mxu0 0.0
  %760 = vmatpush.msra.mxu0 0.0
  %761 = vmatpush.msra.mxu0 0.0
  %762 = vmatpush.msra.mxu0 0.0
  %763 = vmatpush.msra.mxu0 0.0
  %764 = vmatpush.msra.mxu0 0.0
  %765 = vmatpush.msra.mxu0 0.0
  %766 = vmatpush.msra.mxu0 0.0
  %767 = vmatpush.msra.mxu0 0.0
  %768 = vmatpush.msra.mxu0 0.0
  %769 = vmatpush.msra.mxu0 0.0
  %770 = vmatpush.msra.mxu0 %v731
  %771 = vmatmul.f32.gmra.mxu0 %v753
  %v772 = vpop.f32.mrf.mxu0
  %v773 = vadd.f32 %v750, %v772
  %774 = vdwg.mxu0
  %775 = vmatpush.msra.mxu0 0.0
  %776 = vmatpush.msra.mxu0 0.0
  %777 = vmatpush.msra.mxu0 0.0
  %778 = vmatpush.msra.mxu0 0.0
  %779 = vmatpush.msra.mxu0 0.0
  %780 = vmatpush.msra.mxu0 0.0
  %781 = vmatpush.msra.mxu0 0.0
  %782 = vmatpush.msra.mxu0 0.0
  %783 = vmatpush.msra.mxu0 0.0
  %784 = vmatpush.msra.mxu0 0.0
  %785 = vmatpush.msra.mxu0 0.0
  %786 = vmatpush.msra.mxu0 0.0
  %787 = vmatpush.msra.mxu0 0.0
  %788 = vmatpush.msra.mxu0 0.0
  %789 = vmatpush.msra.mxu0 0.0
  %790 = vmatpush.msra.mxu0 %v732
  %791 = vmatmul.f32.gmra.mxu0 %v753
  %v792 = vpop.f32.mrf.mxu0
  %v793 = vadd.f32 %v750, %v792
  %794 = vdwg.mxu0
  %795 = vmatpush.msra.mxu0 0.0
  %796 = vmatpush.msra.mxu0 0.0
  %797 = vmatpush.msra.mxu0 0.0
  %798 = vmatpush.msra.mxu0 0.0
  %799 = vmatpush.msra.mxu0 0.0
  %800 = vmatpush.msra.mxu0 0.0
  %801 = vmatpush.msra.mxu0 0.0
  %802 = vmatpush.msra.mxu0 0.0
  %803 = vmatpush.msra.mxu0 0.0
  %804 = vmatpush.msra.mxu0 0.0
  %805 = vmatpush.msra.mxu0 0.0
  %806 = vmatpush.msra.mxu0 0.0
  %807 = vmatpush.msra.mxu0 0.0
  %808 = vmatpush.msra.mxu0 0.0
  %809 = vmatpush.msra.mxu0 0.0
  %810 = vmatpush.msra.mxu0 %v733
  %811 = vmatmul.f32.gmra.mxu0 %v753
  %v812 = vpop.f32.mrf.mxu0
  %v813 = vadd.f32 %v750, %v812
  %814 = vdwg.mxu0
  %815 = vmatpush.msra.mxu0 0.0
  %816 = vmatpush.msra.mxu0 0.0
  %817 = vmatpush.msra.mxu0 0.0
  %818 = vmatpush.msra.mxu0 0.0
  %819 = vmatpush.msra.mxu0 0.0
  %820 = vmatpush.msra.mxu0 0.0
  %821 = vmatpush.msra.mxu0 0.0
  %822 = vmatpush.msra.mxu0 0.0
  %823 = vmatpush.msra.mxu0 0.0
  %824 = vmatpush.msra.mxu0 0.0
  %825 = vmatpush.msra.mxu0 0.0
  %826 = vmatpush.msra.mxu0 0.0
  %827 = vmatpush.msra.mxu0 0.0
  %828 = vmatpush.msra.mxu0 0.0
  %829 = vmatpush.msra.mxu0 0.0
  %830 = vmatpush.msra.mxu0 %v734
  %831 = vmatmul.f32.gmra.mxu0 %v753
  %v832 = vpop.f32.mrf.mxu0
  %v833 = vadd.f32 %v750, %v832
  %834 = vdwg.mxu0
  %835 = vmatpush.msra.mxu0 0.0
  %836 = vmatpush.msra.mxu0 0.0
  %837 = vmatpush.msra.mxu0 0.0
  %838 = vmatpush.msra.mxu0 0.0
  %839 = vmatpush.msra.mxu0 0.0
  %840 = vmatpush.msra.mxu0 0.0
  %841 = vmatpush.msra.mxu0 0.0
  %842 = vmatpush.msra.mxu0 0.0
  %843 = vmatpush.msra.mxu0 0.0
  %844 = vmatpush.msra.mxu0 0.0
  %845 = vmatpush.msra.mxu0 0.0
  %846 = vmatpush.msra.mxu0 0.0
  %847 = vmatpush.msra.mxu0 0.0
  %848 = vmatpush.msra.mxu0 0.0
  %849 = vmatpush.msra.mxu0 0.0
  %850 = vmatpush.msra.mxu0 %v735
  %851 = vmatmul.f32.gmra.mxu0 %v753
  %v852 = vpop.f32.mrf.mxu0
  %v853 = vadd.f32 %v750, %v852
  %854 = vdwg.mxu0
  %855 = vmatpush.msra.mxu0 0.0
  %856 = vmatpush.msra.mxu0 0.0
  %857 = vmatpush.msra.mxu0 0.0
  %858 = vmatpush.msra.mxu0 0.0
  %859 = vmatpush.msra.mxu0 0.0
  %860 = vmatpush.msra.mxu0 0.0
  %861 = vmatpush.msra.mxu0 0.0
  %862 = vmatpush.msra.mxu0 0.0
  %863 = vmatpush.msra.mxu0 0.0
  %864 = vmatpush.msra.mxu0 0.0
  %865 = vmatpush.msra.mxu0 0.0
  %866 = vmatpush.msra.mxu0 0.0
  %867 = vmatpush.msra.mxu0 0.0
  %868 = vmatpush.msra.mxu0 0.0
  %869 = vmatpush.msra.mxu0 0.0
  %870 = vmatpush.msra.mxu0 %v736
  %871 = vmatmul.f32.gmra.mxu0 %v753
  %v872 = vpop.f32.mrf.mxu0
  %v873 = vadd.f32 %v750, %v872
  %874 = vdwg.mxu0
  %875 = vmatpush.msra.mxu0 0.0
  %876 = vmatpush.msra.mxu0 0.0
  %877 = vmatpush.msra.mxu0 0.0
  %878 = vmatpush.msra.mxu0 0.0
  %879 = vmatpush.msra.mxu0 0.0
  %880 = vmatpush.msra.mxu0 0.0
  %881 = vmatpush.msra.mxu0 0.0
  %882 = vmatpush.msra.mxu0 0.0
  %883 = vmatpush.msra.mxu0 0.0
  %884 = vmatpush.msra.mxu0 0.0
  %885 = vmatpush.msra.mxu0 0.0
  %886 = vmatpush.msra.mxu0 0.0
  %887 = vmatpush.msra.mxu0 0.0
  %888 = vmatpush.msra.mxu0 0.0
  %889 = vmatpush.msra.mxu0 0.0
  %890 = vmatpush.msra.mxu0 %v737
  %891 = vmatmul.f32.gmra.mxu0 %v753
  %v892 = vpop.f32.mrf.mxu0
  %v893 = vadd.f32 %v750, %v892
  %894 = vdwg.mxu0
  %895 = vmatpush.msra.mxu0 0.0
  %896 = vmatpush.msra.mxu0 0.0
  %897 = vmatpush.msra.mxu0 0.0
  %898 = vmatpush.msra.mxu0 0.0
  %899 = vmatpush.msra.mxu0 0.0
  %900 = vmatpush.msra.mxu0 0.0
  %901 = vmatpush.msra.mxu0 0.0
  %902 = vmatpush.msra.mxu0 0.0
  %903 = vmatpush.msra.mxu0 0.0
  %904 = vmatpush.msra.mxu0 0.0
  %905 = vmatpush.msra.mxu0 0.0
  %906 = vmatpush.msra.mxu0 0.0
  %907 = vmatpush.msra.mxu0 0.0
  %908 = vmatpush.msra.mxu0 0.0
  %909 = vmatpush.msra.mxu0 0.0
  %910 = vmatpush.msra.mxu0 %v738
  %911 = vmatmul.f32.gmra.mxu0 %v753
  %v912 = vpop.f32.mrf.mxu0
  %v913 = vadd.f32 %v750, %v912
  %914 = vdwg.mxu0
  %915 = vmatpush.msra.mxu0 0.0
  %916 = vmatpush.msra.mxu0 0.0
  %917 = vmatpush.msra.mxu0 0.0
  %918 = vmatpush.msra.mxu0 0.0
  %919 = vmatpush.msra.mxu0 0.0
  %920 = vmatpush.msra.mxu0 0.0
  %921 = vmatpush.msra.mxu0 0.0
  %922 = vmatpush.msra.mxu0 0.0
  %923 = vmatpush.msra.mxu0 0.0
  %924 = vmatpush.msra.mxu0 0.0
  %925 = vmatpush.msra.mxu0 0.0
  %926 = vmatpush.msra.mxu0 0.0
  %927 = vmatpush.msra.mxu0 0.0
  %928 = vmatpush.msra.mxu0 0.0
  %929 = vmatpush.msra.mxu0 0.0
  %930 = vmatpush.msra.mxu0 %v739
  %931 = vmatmul.f32.gmra.mxu0 %v753
  %v932 = vpop.f32.mrf.mxu0
  %v933 = vadd.f32 %v750, %v932
  %934 = vdwg.mxu0
  %935 = vmatpush.msra.mxu0 0.0
  %936 = vmatpush.msra.mxu0 0.0
  %937 = vmatpush.msra.mxu0 0.0
  %938 = vmatpush.msra.mxu0 0.0
  %939 = vmatpush.msra.mxu0 0.0
  %940 = vmatpush.msra.mxu0 0.0
  %941 = vmatpush.msra.mxu0 0.0
  %942 = vmatpush.msra.mxu0 0.0
  %943 = vmatpush.msra.mxu0 0.0
  %944 = vmatpush.msra.mxu0 0.0
  %945 = vmatpush.msra.mxu0 0.0
  %946 = vmatpush.msra.mxu0 0.0
  %947 = vmatpush.msra.mxu0 0.0
  %948 = vmatpush.msra.mxu0 0.0
  %949 = vmatpush.msra.mxu0 0.0
  %950 = vmatpush.msra.mxu0 %v740
  %951 = vmatmul.f32.gmra.mxu0 %v753
  %v952 = vpop.f32.mrf.mxu0
  %v953 = vadd.f32 %v750, %v952
  %954 = vdwg.mxu0
  %955 = vmatpush.msra.mxu0 0.0
  %956 = vmatpush.msra.mxu0 0.0
  %957 = vmatpush.msra.mxu0 0.0
  %958 = vmatpush.msra.mxu0 0.0
  %959 = vmatpush.msra.mxu0 0.0
  %960 = vmatpush.msra.mxu0 0.0
  %961 = vmatpush.msra.mxu0 0.0
  %962 = vmatpush.msra.mxu0 0.0
  %963 = vmatpush.msra.mxu0 0.0
  %964 = vmatpush.msra.mxu0 0.0
  %965 = vmatpush.msra.mxu0 0.0
  %966 = vmatpush.msra.mxu0 0.0
  %967 = vmatpush.msra.mxu0 0.0
  %968 = vmatpush.msra.mxu0 0.0
  %969 = vmatpush.msra.mxu0 0.0
  %970 = vmatpush.msra.mxu0 %v741
  %971 = vmatmul.f32.gmra.mxu0 %v753
  %v972 = vpop.f32.mrf.mxu0
  %v973 = vadd.f32 %v750, %v972
  %974 = vdwg.mxu0
  %975 = vmatpush.msra.mxu0 0.0
  %976 = vmatpush.msra.mxu0 0.0
  %977 = vmatpush.msra.mxu0 0.0
  %978 = vmatpush.msra.mxu0 0.0
  %979 = vmatpush.msra.mxu0 0.0
  %980 = vmatpush.msra.mxu0 0.0
  %981 = vmatpush.msra.mxu0 0.0
  %982 = vmatpush.msra.mxu0 0.0
  %983 = vmatpush.msra.mxu0 0.0
  %984 = vmatpush.msra.mxu0 0.0
  %985 = vmatpush.msra.mxu0 0.0
  %986 = vmatpush.msra.mxu0 0.0
  %987 = vmatpush.msra.mxu0 0.0
  %988 = vmatpush.msra.mxu0 0.0
  %989 = vmatpush.msra.mxu0 0.0
  %990 = vmatpush.msra.mxu0 %v742
  %991 = vmatmul.f32.gmra.mxu0 %v753
  %v992 = vpop.f32.mrf.mxu0
  %v993 = vadd.f32 %v750, %v992
  %994 = vdwg.mxu0
  %995 = vmatpush.msra.mxu0 0.0
  %996 = vmatpush.msra.mxu0 0.0
  %997 = vmatpush.msra.mxu0 0.0
  %998 = vmatpush.msra.mxu0 0.0
  %999 = vmatpush.msra.mxu0 0.0
  %1000 = vmatpush.msra.mxu0 0.0
  %1001 = vmatpush.msra.mxu0 0.0
  %1002 = vmatpush.msra.mxu0 0.0
  %1003 = vmatpush.msra.mxu0 0.0
  %1004 = vmatpush.msra.mxu0 0.0
  %1005 = vmatpush.msra.mxu0 0.0
  %1006 = vmatpush.msra.mxu0 0.0
  %1007 = vmatpush.msra.mxu0 0.0
  %1008 = vmatpush.msra.mxu0 0.0
  %1009 = vmatpush.msra.mxu0 0.0
  %1010 = vmatpush.msra.mxu0 %v743
  %1011 = vmatmul.f32.gmra.mxu0 %v753
  %v1012 = vpop.f32.mrf.mxu0
  %v1013 = vadd.f32 %v750, %v1012
  %1014 = vdwg.mxu0
  %1015 = vmatpush.msra.mxu0 0.0
  %1016 = vmatpush.msra.mxu0 0.0
  %1017 = vmatpush.msra.mxu0 0.0
  %1018 = vmatpush.msra.mxu0 0.0
  %1019 = vmatpush.msra.mxu0 0.0
  %1020 = vmatpush.msra.mxu0 0.0
  %1021 = vmatpush.msra.mxu0 0.0
  %1022 = vmatpush.msra.mxu0 0.0
  %1023 = vmatpush.msra.mxu0 0.0
  %1024 = vmatpush.msra.mxu0 0.0
  %1025 = vmatpush.msra.mxu0 0.0
  %1026 = vmatpush.msra.mxu0 0.0
  %1027 = vmatpush.msra.mxu0 0.0
  %1028 = vmatpush.msra.mxu0 0.0
  %1029 = vmatpush.msra.mxu0 0.0
  %1030 = vmatpush.msra.mxu0 %v744
  %1031 = vmatmul.f32.gmra.mxu0 %v753
  %v1032 = vpop.f32.mrf.mxu0
  %v1033 = vadd.f32 %v750, %v1032
  %1034 = vdwg.mxu0
  %1035 = vmatpush.msra.mxu0 0.0
  %1036 = vmatpush.msra.mxu0 0.0
  %1037 = vmatpush.msra.mxu0 0.0
  %1038 = vmatpush.msra.mxu0 0.0
  %1039 = vmatpush.msra.mxu0 0.0
  %1040 = vmatpush.msra.mxu0 0.0
  %1041 = vmatpush.msra.mxu0 0.0
  %1042 = vmatpush.msra.mxu0 0.0
  %1043 = vmatpush.msra.mxu0 0.0
  %1044 = vmatpush.msra.mxu0 0.0
  %1045 = vmatpush.msra.mxu0 0.0
  %1046 = vmatpush.msra.mxu0 0.0
  %1047 = vmatpush.msra.mxu0 0.0
  %1048 = vmatpush.msra.mxu0 0.0
  %1049 = vmatpush.msra.mxu0 0.0
  %1050 = vmatpush.msra.mxu0 %v745
  %1051 = vmatmul.f32.gmra.mxu0 %v753
  %v1052 = vpop.f32.mrf.mxu0
  %v1053 = vadd.f32 %v750, %v1052
  %1054 = vdwg.mxu0
  %1055 = vmatpush.msra.mxu0 0.0
  %1056 = vmatpush.msra.mxu0 0.0
  %1057 = vmatpush.msra.mxu0 0.0
  %1058 = vmatpush.msra.mxu0 0.0
  %1059 = vmatpush.msra.mxu0 0.0
  %1060 = vmatpush.msra.mxu0 0.0
  %1061 = vmatpush.msra.mxu0 0.0
  %1062 = vmatpush.msra.mxu0 0.0
  %1063 = vmatpush.msra.mxu0 0.0
  %1064 = vmatpush.msra.mxu0 0.0
  %1065 = vmatpush.msra.mxu0 0.0
  %1066 = vmatpush.msra.mxu0 0.0
  %1067 = vmatpush.msra.mxu0 0.0
  %1068 = vmatpush.msra.mxu0 0.0
  %1069 = vmatpush.msra.mxu0 0.0
  %1070 = vmatpush.msra.mxu0 %v746
  %1071 = vmatmul.f32.gmra.mxu0 %v753
  %v1072 = vpop.f32.mrf.mxu0
  %v1073 = vadd.f32 %v750, %v1072
  %1074 = vdwg.mxu0
  %v1075 = vadd.f32 %v773, %v26
  %v1076 = vadd.f32 %v793, %v27
  %v1077 = vadd.f32 %v813, %v28
  %v1078 = vadd.f32 %v833, %v29
  %v1079 = vadd.f32 %v853, %v30
  %v1080 = vadd.f32 %v873, %v31
  %v1081 = vadd.f32 %v893, %v32
  %v1082 = vadd.f32 %v913, %v33
  %v1083 = vadd.f32 %v933, %v34
  %v1084 = vadd.f32 %v953, %v35
  %v1085 = vadd.f32 %v973, %v36
  %v1086 = vadd.f32 %v993, %v37
  %v1087 = vadd.f32 %v1013, %v38
  %v1088 = vadd.f32 %v1033, %v39
  %v1089 = vadd.f32 %v1053, %v40
  %v1090 = vadd.f32 %v1073, %v41
  %1091 = vst [vmem:[%s5] sm:$0xff] %v1075
  %1092 = vst [vmem:[%s5 + $0x8] sm:$0xff] %v1076
  %1093 = vst [vmem:[%s5 + $0x10] sm:$0xff] %v1077
  %1094 = vst [vmem:[%s5 + $0x18] sm:$0xff] %v1078
  %1095 = vst [vmem:[%s5 + $0x20] sm:$0xff] %v1079
  %1096 = vst [vmem:[%s5 + $0x28] sm:$0xff] %v1080
  %1097 = vst [vmem:[%s5 + $0x30] sm:$0xff] %v1081
  %1098 = vst [vmem:[%s5 + $0x38] sm:$0xff] %v1082
  %1099 = vst [vmem:[%s5 + $0x40] sm:$0xff] %v1083
  %1100 = vst [vmem:[%s5 + $0x48] sm:$0xff] %v1084
  %1101 = vst [vmem:[%s5 + $0x50] sm:$0xff] %v1085
  %1102 = vst [vmem:[%s5 + $0x58] sm:$0xff] %v1086
  %1103 = vst [vmem:[%s5 + $0x60] sm:$0xff] %v1087
  %1104 = vst [vmem:[%s5 + $0x68] sm:$0xff] %v1088
  %1105 = vst [vmem:[%s5 + $0x70] sm:$0xff] %v1089
  %1106 = vst [vmem:[%s5 + $0x78] sm:$0xff] %v1090
  %s1107 = scalar_lea.vmem %s0, 128
  %v1108 = vld [vmem:[%s1107] sm:$0xff]
  %v1109 = vld [vmem:[%s1107 + $0x8] sm:$0xff]
  %v1110 = vld [vmem:[%s1107 + $0x10] sm:$0xff]
  %v1111 = vld [vmem:[%s1107 + $0x18] sm:$0xff]
  %v1112 = vld [vmem:[%s1107 + $0x20] sm:$0xff]
  %v1113 = vld [vmem:[%s1107 + $0x28] sm:$0xff]
  %v1114 = vld [vmem:[%s1107 + $0x30] sm:$0xff]
  %v1115 = vld [vmem:[%s1107 + $0x38] sm:$0xff]
  %v1116 = vld [vmem:[%s1107 + $0x40] sm:$0xff]
  %v1117 = vld [vmem:[%s1107 + $0x48] sm:$0xff]
  %v1118 = vld [vmem:[%s1107 + $0x50] sm:$0xff]
  %v1119 = vld [vmem:[%s1107 + $0x58] sm:$0xff]
  %v1120 = vld [vmem:[%s1107 + $0x60] sm:$0xff]
  %v1121 = vld [vmem:[%s1107 + $0x68] sm:$0xff]
  %v1122 = vld [vmem:[%s1107 + $0x70] sm:$0xff]
  %v1123 = vld [vmem:[%s1107 + $0x78] sm:$0xff]
  %1124 = vmatpush.msra.mxu0 0.0
  %1125 = vmatpush.msra.mxu0 0.0
  %1126 = vmatpush.msra.mxu0 0.0
  %1127 = vmatpush.msra.mxu0 0.0
  %1128 = vmatpush.msra.mxu0 0.0
  %1129 = vmatpush.msra.mxu0 0.0
  %1130 = vmatpush.msra.mxu0 0.0
  %1131 = vmatpush.msra.mxu0 0.0
  %1132 = vmatpush.msra.mxu0 0.0
  %1133 = vmatpush.msra.mxu0 0.0
  %1134 = vmatpush.msra.mxu0 0.0
  %1135 = vmatpush.msra.mxu0 0.0
  %1136 = vmatpush.msra.mxu0 0.0
  %1137 = vmatpush.msra.mxu0 0.0
  %1138 = vmatpush.msra.mxu0 0.0
  %1139 = vmatpush.msra.mxu0 %v1108
  %1140 = vmatmul.f32.gmra.mxu0 %v54
  %v1141 = vpop.f32.mrf.mxu0
  %v1142 = vadd.f32 %v45, %v1141
  %1143 = vmatmul.f32.gmra.mxu0 %v57
  %v1144 = vpop.f32.mrf.mxu0
  %v1145 = vadd.f32 %v50, %v1144
  %1146 = vdwg.mxu0
  %1147 = vmatpush.msra.mxu0 0.0
  %1148 = vmatpush.msra.mxu0 0.0
  %1149 = vmatpush.msra.mxu0 0.0
  %1150 = vmatpush.msra.mxu0 0.0
  %1151 = vmatpush.msra.mxu0 0.0
  %1152 = vmatpush.msra.mxu0 0.0
  %1153 = vmatpush.msra.mxu0 0.0
  %1154 = vmatpush.msra.mxu0 0.0
  %1155 = vmatpush.msra.mxu0 0.0
  %1156 = vmatpush.msra.mxu0 0.0
  %1157 = vmatpush.msra.mxu0 0.0
  %1158 = vmatpush.msra.mxu0 0.0
  %1159 = vmatpush.msra.mxu0 0.0
  %1160 = vmatpush.msra.mxu0 0.0
  %1161 = vmatpush.msra.mxu0 0.0
  %1162 = vmatpush.msra.mxu0 %v1109
  %1163 = vmatmul.f32.gmra.mxu0 %v54
  %v1164 = vpop.f32.mrf.mxu0
  %v1165 = vadd.f32 %v45, %v1164
  %1166 = vmatmul.f32.gmra.mxu0 %v57
  %v1167 = vpop.f32.mrf.mxu0
  %v1168 = vadd.f32 %v50, %v1167
  %1169 = vdwg.mxu0
  %1170 = vmatpush.msra.mxu0 0.0
  %1171 = vmatpush.msra.mxu0 0.0
  %1172 = vmatpush.msra.mxu0 0.0
  %1173 = vmatpush.msra.mxu0 0.0
  %1174 = vmatpush.msra.mxu0 0.0
  %1175 = vmatpush.msra.mxu0 0.0
  %1176 = vmatpush.msra.mxu0 0.0
  %1177 = vmatpush.msra.mxu0 0.0
  %1178 = vmatpush.msra.mxu0 0.0
  %1179 = vmatpush.msra.mxu0 0.0
  %1180 = vmatpush.msra.mxu0 0.0
  %1181 = vmatpush.msra.mxu0 0.0
  %1182 = vmatpush.msra.mxu0 0.0
  %1183 = vmatpush.msra.mxu0 0.0
  %1184 = vmatpush.msra.mxu0 0.0
  %1185 = vmatpush.msra.mxu0 %v1110
  %1186 = vmatmul.f32.gmra.mxu0 %v54
  %v1187 = vpop.f32.mrf.mxu0
  %v1188 = vadd.f32 %v45, %v1187
  %1189 = vmatmul.f32.gmra.mxu0 %v57
  %v1190 = vpop.f32.mrf.mxu0
  %v1191 = vadd.f32 %v50, %v1190
  %1192 = vdwg.mxu0
  %1193 = vmatpush.msra.mxu0 0.0
  %1194 = vmatpush.msra.mxu0 0.0
  %1195 = vmatpush.msra.mxu0 0.0
  %1196 = vmatpush.msra.mxu0 0.0
  %1197 = vmatpush.msra.mxu0 0.0
  %1198 = vmatpush.msra.mxu0 0.0
  %1199 = vmatpush.msra.mxu0 0.0
  %1200 = vmatpush.msra.mxu0 0.0
  %1201 = vmatpush.msra.mxu0 0.0
  %1202 = vmatpush.msra.mxu0 0.0
  %1203 = vmatpush.msra.mxu0 0.0
  %1204 = vmatpush.msra.mxu0 0.0
  %1205 = vmatpush.msra.mxu0 0.0
  %1206 = vmatpush.msra.mxu0 0.0
  %1207 = vmatpush.msra.mxu0 0.0
  %1208 = vmatpush.msra.mxu0 %v1111
  %1209 = vmatmul.f32.gmra.mxu0 %v54
  %v1210 = vpop.f32.mrf.mxu0
  %v1211 = vadd.f32 %v45, %v1210
  %1212 = vmatmul.f32.gmra.mxu0 %v57
  %v1213 = vpop.f32.mrf.mxu0
  %v1214 = vadd.f32 %v50, %v1213
  %1215 = vdwg.mxu0
  %1216 = vmatpush.msra.mxu0 0.0
  %1217 = vmatpush.msra.mxu0 0.0
  %1218 = vmatpush.msra.mxu0 0.0
  %1219 = vmatpush.msra.mxu0 0.0
  %1220 = vmatpush.msra.mxu0 0.0
  %1221 = vmatpush.msra.mxu0 0.0
  %1222 = vmatpush.msra.mxu0 0.0
  %1223 = vmatpush.msra.mxu0 0.0
  %1224 = vmatpush.msra.mxu0 0.0
  %1225 = vmatpush.msra.mxu0 0.0
  %1226 = vmatpush.msra.mxu0 0.0
  %1227 = vmatpush.msra.mxu0 0.0
  %1228 = vmatpush.msra.mxu0 0.0
  %1229 = vmatpush.msra.mxu0 0.0
  %1230 = vmatpush.msra.mxu0 0.0
  %1231 = vmatpush.msra.mxu0 %v1112
  %1232 = vmatmul.f32.gmra.mxu0 %v54
  %v1233 = vpop.f32.mrf.mxu0
  %v1234 = vadd.f32 %v45, %v1233
  %1235 = vmatmul.f32.gmra.mxu0 %v57
  %v1236 = vpop.f32.mrf.mxu0
  %v1237 = vadd.f32 %v50, %v1236
  %1238 = vdwg.mxu0
  %1239 = vmatpush.msra.mxu0 0.0
  %1240 = vmatpush.msra.mxu0 0.0
  %1241 = vmatpush.msra.mxu0 0.0
  %1242 = vmatpush.msra.mxu0 0.0
  %1243 = vmatpush.msra.mxu0 0.0
  %1244 = vmatpush.msra.mxu0 0.0
  %1245 = vmatpush.msra.mxu0 0.0
  %1246 = vmatpush.msra.mxu0 0.0
  %1247 = vmatpush.msra.mxu0 0.0
  %1248 = vmatpush.msra.mxu0 0.0
  %1249 = vmatpush.msra.mxu0 0.0
  %1250 = vmatpush.msra.mxu0 0.0
  %1251 = vmatpush.msra.mxu0 0.0
  %1252 = vmatpush.msra.mxu0 0.0
  %1253 = vmatpush.msra.mxu0 0.0
  %1254 = vmatpush.msra.mxu0 %v1113
  %1255 = vmatmul.f32.gmra.mxu0 %v54
  %v1256 = vpop.f32.mrf.mxu0
  %v1257 = vadd.f32 %v45, %v1256
  %1258 = vmatmul.f32.gmra.mxu0 %v57
  %v1259 = vpop.f32.mrf.mxu0
  %v1260 = vadd.f32 %v50, %v1259
  %1261 = vdwg.mxu0
  %1262 = vmatpush.msra.mxu0 0.0
  %1263 = vmatpush.msra.mxu0 0.0
  %1264 = vmatpush.msra.mxu0 0.0
  %1265 = vmatpush.msra.mxu0 0.0
  %1266 = vmatpush.msra.mxu0 0.0
  %1267 = vmatpush.msra.mxu0 0.0
  %1268 = vmatpush.msra.mxu0 0.0
  %1269 = vmatpush.msra.mxu0 0.0
  %1270 = vmatpush.msra.mxu0 0.0
  %1271 = vmatpush.msra.mxu0 0.0
  %1272 = vmatpush.msra.mxu0 0.0
  %1273 = vmatpush.msra.mxu0 0.0
  %1274 = vmatpush.msra.mxu0 0.0
  %1275 = vmatpush.msra.mxu0 0.0
  %1276 = vmatpush.msra.mxu0 0.0
  %1277 = vmatpush.msra.mxu0 %v1114
  %1278 = vmatmul.f32.gmra.mxu0 %v54
  %v1279 = vpop.f32.mrf.mxu0
  %v1280 = vadd.f32 %v45, %v1279
  %1281 = vmatmul.f32.gmra.mxu0 %v57
  %v1282 = vpop.f32.mrf.mxu0
  %v1283 = vadd.f32 %v50, %v1282
  %1284 = vdwg.mxu0
  %1285 = vmatpush.msra.mxu0 0.0
  %1286 = vmatpush.msra.mxu0 0.0
  %1287 = vmatpush.msra.mxu0 0.0
  %1288 = vmatpush.msra.mxu0 0.0
  %1289 = vmatpush.msra.mxu0 0.0
  %1290 = vmatpush.msra.mxu0 0.0
  %1291 = vmatpush.msra.mxu0 0.0
  %1292 = vmatpush.msra.mxu0 0.0
  %1293 = vmatpush.msra.mxu0 0.0
  %1294 = vmatpush.msra.mxu0 0.0
  %1295 = vmatpush.msra.mxu0 0.0
  %1296 = vmatpush.msra.mxu0 0.0
  %1297 = vmatpush.msra.mxu0 0.0
  %1298 = vmatpush.msra.mxu0 0.0
  %1299 = vmatpush.msra.mxu0 0.0
  %1300 = vmatpush.msra.mxu0 %v1115
  %1301 = vmatmul.f32.gmra.mxu0 %v54
  %v1302 = vpop.f32.mrf.mxu0
  %v1303 = vadd.f32 %v45, %v1302
  %1304 = vmatmul.f32.gmra.mxu0 %v57
  %v1305 = vpop.f32.mrf.mxu0
  %v1306 = vadd.f32 %v50, %v1305
  %1307 = vdwg.mxu0
  %1308 = vmatpush.msra.mxu0 0.0
  %1309 = vmatpush.msra.mxu0 0.0
  %1310 = vmatpush.msra.mxu0 0.0
  %1311 = vmatpush.msra.mxu0 0.0
  %1312 = vmatpush.msra.mxu0 0.0
  %1313 = vmatpush.msra.mxu0 0.0
  %1314 = vmatpush.msra.mxu0 0.0
  %1315 = vmatpush.msra.mxu0 0.0
  %1316 = vmatpush.msra.mxu0 0.0
  %1317 = vmatpush.msra.mxu0 0.0
  %1318 = vmatpush.msra.mxu0 0.0
  %1319 = vmatpush.msra.mxu0 0.0
  %1320 = vmatpush.msra.mxu0 0.0
  %1321 = vmatpush.msra.mxu0 0.0
  %1322 = vmatpush.msra.mxu0 0.0
  %1323 = vmatpush.msra.mxu0 %v1116
  %1324 = vmatmul.f32.gmra.mxu0 %v54
  %v1325 = vpop.f32.mrf.mxu0
  %v1326 = vadd.f32 %v45, %v1325
  %1327 = vmatmul.f32.gmra.mxu0 %v57
  %v1328 = vpop.f32.mrf.mxu0
  %v1329 = vadd.f32 %v50, %v1328
  %1330 = vdwg.mxu0
  %1331 = vmatpush.msra.mxu0 0.0
  %1332 = vmatpush.msra.mxu0 0.0
  %1333 = vmatpush.msra.mxu0 0.0
  %1334 = vmatpush.msra.mxu0 0.0
  %1335 = vmatpush.msra.mxu0 0.0
  %1336 = vmatpush.msra.mxu0 0.0
  %1337 = vmatpush.msra.mxu0 0.0
  %1338 = vmatpush.msra.mxu0 0.0
  %1339 = vmatpush.msra.mxu0 0.0
  %1340 = vmatpush.msra.mxu0 0.0
  %1341 = vmatpush.msra.mxu0 0.0
  %1342 = vmatpush.msra.mxu0 0.0
  %1343 = vmatpush.msra.mxu0 0.0
  %1344 = vmatpush.msra.mxu0 0.0
  %1345 = vmatpush.msra.mxu0 0.0
  %1346 = vmatpush.msra.mxu0 %v1117
  %1347 = vmatmul.f32.gmra.mxu0 %v54
  %v1348 = vpop.f32.mrf.mxu0
  %v1349 = vadd.f32 %v45, %v1348
  %1350 = vmatmul.f32.gmra.mxu0 %v57
  %v1351 = vpop.f32.mrf.mxu0
  %v1352 = vadd.f32 %v50, %v1351
  %1353 = vdwg.mxu0
  %1354 = vmatpush.msra.mxu0 0.0
  %1355 = vmatpush.msra.mxu0 0.0
  %1356 = vmatpush.msra.mxu0 0.0
  %1357 = vmatpush.msra.mxu0 0.0
  %1358 = vmatpush.msra.mxu0 0.0
  %1359 = vmatpush.msra.mxu0 0.0
  %1360 = vmatpush.msra.mxu0 0.0
  %1361 = vmatpush.msra.mxu0 0.0
  %1362 = vmatpush.msra.mxu0 0.0
  %1363 = vmatpush.msra.mxu0 0.0
  %1364 = vmatpush.msra.mxu0 0.0
  %1365 = vmatpush.msra.mxu0 0.0
  %1366 = vmatpush.msra.mxu0 0.0
  %1367 = vmatpush.msra.mxu0 0.0
  %1368 = vmatpush.msra.mxu0 0.0
  %1369 = vmatpush.msra.mxu0 %v1118
  %1370 = vmatmul.f32.gmra.mxu0 %v54
  %v1371 = vpop.f32.mrf.mxu0
  %v1372 = vadd.f32 %v45, %v1371
  %1373 = vmatmul.f32.gmra.mxu0 %v57
  %v1374 = vpop.f32.mrf.mxu0
  %v1375 = vadd.f32 %v50, %v1374
  %1376 = vdwg.mxu0
  %1377 = vmatpush.msra.mxu0 0.0
  %1378 = vmatpush.msra.mxu0 0.0
  %1379 = vmatpush.msra.mxu0 0.0
  %1380 = vmatpush.msra.mxu0 0.0
  %1381 = vmatpush.msra.mxu0 0.0
  %1382 = vmatpush.msra.mxu0 0.0
  %1383 = vmatpush.msra.mxu0 0.0
  %1384 = vmatpush.msra.mxu0 0.0
  %1385 = vmatpush.msra.mxu0 0.0
  %1386 = vmatpush.msra.mxu0 0.0
  %1387 = vmatpush.msra.mxu0 0.0
  %1388 = vmatpush.msra.mxu0 0.0
  %1389 = vmatpush.msra.mxu0 0.0
  %1390 = vmatpush.msra.mxu0 0.0
  %1391 = vmatpush.msra.mxu0 0.0
  %1392 = vmatpush.msra.mxu0 %v1119
  %1393 = vmatmul.f32.gmra.mxu0 %v54
  %v1394 = vpop.f32.mrf.mxu0
  %v1395 = vadd.f32 %v45, %v1394
  %1396 = vmatmul.f32.gmra.mxu0 %v57
  %v1397 = vpop.f32.mrf.mxu0
  %v1398 = vadd.f32 %v50, %v1397
  %1399 = vdwg.mxu0
  %1400 = vmatpush.msra.mxu0 0.0
  %1401 = vmatpush.msra.mxu0 0.0
  %1402 = vmatpush.msra.mxu0 0.0
  %1403 = vmatpush.msra.mxu0 0.0
  %1404 = vmatpush.msra.mxu0 0.0
  %1405 = vmatpush.msra.mxu0 0.0
  %1406 = vmatpush.msra.mxu0 0.0
  %1407 = vmatpush.msra.mxu0 0.0
  %1408 = vmatpush.msra.mxu0 0.0
  %1409 = vmatpush.msra.mxu0 0.0
  %1410 = vmatpush.msra.mxu0 0.0
  %1411 = vmatpush.msra.mxu0 0.0
  %1412 = vmatpush.msra.mxu0 0.0
  %1413 = vmatpush.msra.mxu0 0.0
  %1414 = vmatpush.msra.mxu0 0.0
  %1415 = vmatpush.msra.mxu0 %v1120
  %1416 = vmatmul.f32.gmra.mxu0 %v54
  %v1417 = vpop.f32.mrf.mxu0
  %v1418 = vadd.f32 %v45, %v1417
  %1419 = vmatmul.f32.gmra.mxu0 %v57
  %v1420 = vpop.f32.mrf.mxu0
  %v1421 = vadd.f32 %v50, %v1420
  %1422 = vdwg.mxu0
  %1423 = vmatpush.msra.mxu0 0.0
  %1424 = vmatpush.msra.mxu0 0.0
  %1425 = vmatpush.msra.mxu0 0.0
  %1426 = vmatpush.msra.mxu0 0.0
  %1427 = vmatpush.msra.mxu0 0.0
  %1428 = vmatpush.msra.mxu0 0.0
  %1429 = vmatpush.msra.mxu0 0.0
  %1430 = vmatpush.msra.mxu0 0.0
  %1431 = vmatpush.msra.mxu0 0.0
  %1432 = vmatpush.msra.mxu0 0.0
  %1433 = vmatpush.msra.mxu0 0.0
  %1434 = vmatpush.msra.mxu0 0.0
  %1435 = vmatpush.msra.mxu0 0.0
  %1436 = vmatpush.msra.mxu0 0.0
  %1437 = vmatpush.msra.mxu0 0.0
  %1438 = vmatpush.msra.mxu0 %v1121
  %1439 = vmatmul.f32.gmra.mxu0 %v54
  %v1440 = vpop.f32.mrf.mxu0
  %v1441 = vadd.f32 %v45, %v1440
  %1442 = vmatmul.f32.gmra.mxu0 %v57
  %v1443 = vpop.f32.mrf.mxu0
  %v1444 = vadd.f32 %v50, %v1443
  %1445 = vdwg.mxu0
  %1446 = vmatpush.msra.mxu0 0.0
  %1447 = vmatpush.msra.mxu0 0.0
  %1448 = vmatpush.msra.mxu0 0.0
  %1449 = vmatpush.msra.mxu0 0.0
  %1450 = vmatpush.msra.mxu0 0.0
  %1451 = vmatpush.msra.mxu0 0.0
  %1452 = vmatpush.msra.mxu0 0.0
  %1453 = vmatpush.msra.mxu0 0.0
  %1454 = vmatpush.msra.mxu0 0.0
  %1455 = vmatpush.msra.mxu0 0.0
  %1456 = vmatpush.msra.mxu0 0.0
  %1457 = vmatpush.msra.mxu0 0.0
  %1458 = vmatpush.msra.mxu0 0.0
  %1459 = vmatpush.msra.mxu0 0.0
  %1460 = vmatpush.msra.mxu0 0.0
  %1461 = vmatpush.msra.mxu0 %v1122
  %1462 = vmatmul.f32.gmra.mxu0 %v54
  %v1463 = vpop.f32.mrf.mxu0
  %v1464 = vadd.f32 %v45, %v1463
  %1465 = vmatmul.f32.gmra.mxu0 %v57
  %v1466 = vpop.f32.mrf.mxu0
  %v1467 = vadd.f32 %v50, %v1466
  %1468 = vdwg.mxu0
  %1469 = vmatpush.msra.mxu0 0.0
  %1470 = vmatpush.msra.mxu0 0.0
  %1471 = vmatpush.msra.mxu0 0.0
  %1472 = vmatpush.msra.mxu0 0.0
  %1473 = vmatpush.msra.mxu0 0.0
  %1474 = vmatpush.msra.mxu0 0.0
  %1475 = vmatpush.msra.mxu0 0.0
  %1476 = vmatpush.msra.mxu0 0.0
  %1477 = vmatpush.msra.mxu0 0.0
  %1478 = vmatpush.msra.mxu0 0.0
  %1479 = vmatpush.msra.mxu0 0.0
  %1480 = vmatpush.msra.mxu0 0.0
  %1481 = vmatpush.msra.mxu0 0.0
  %1482 = vmatpush.msra.mxu0 0.0
  %1483 = vmatpush.msra.mxu0 0.0
  %1484 = vmatpush.msra.mxu0 %v1123
  %1485 = vmatmul.f32.gmra.mxu0 %v54
  %v1486 = vpop.f32.mrf.mxu0
  %v1487 = vadd.f32 %v45, %v1486
  %1488 = vmatmul.f32.gmra.mxu0 %v57
  %v1489 = vpop.f32.mrf.mxu0
  %v1490 = vadd.f32 %v50, %v1489
  %1491 = vdwg.mxu0
  %v1492 = vxor.u32 %v1142, 2147483648
  %v1493 = vxor.u32 %v1165, 2147483648
  %v1494 = vxor.u32 %v1188, 2147483648
  %v1495 = vxor.u32 %v1211, 2147483648
  %v1496 = vxor.u32 %v1234, 2147483648
  %v1497 = vxor.u32 %v1257, 2147483648
  %v1498 = vxor.u32 %v1280, 2147483648
  %v1499 = vxor.u32 %v1303, 2147483648
  %v1500 = vxor.u32 %v1326, 2147483648
  %v1501 = vxor.u32 %v1349, 2147483648
  %v1502 = vxor.u32 %v1372, 2147483648
  %v1503 = vxor.u32 %v1395, 2147483648
  %v1504 = vxor.u32 %v1418, 2147483648
  %v1505 = vxor.u32 %v1441, 2147483648
  %v1506 = vxor.u32 %v1464, 2147483648
  %v1507 = vxor.u32 %v1487, 2147483648
  %v1508 = vmul.f32 %v1492, 1.442695
  %v1509 = vpow.pop %v1508
  %v1510 = vmul.f32 %v1493, 1.442695
  %v1511 = vpow.pop %v1510
  %v1512 = vmul.f32 %v1494, 1.442695
  %v1513 = vpow.pop %v1512
  %v1514 = vmul.f32 %v1495, 1.442695
  %v1515 = vpow.pop %v1514
  %v1516 = vmul.f32 %v1496, 1.442695
  %v1517 = vpow.pop %v1516
  %v1518 = vmul.f32 %v1497, 1.442695
  %v1519 = vpow.pop %v1518
  %v1520 = vmul.f32 %v1498, 1.442695
  %v1521 = vpow.pop %v1520
  %v1522 = vmul.f32 %v1499, 1.442695
  %v1523 = vpow.pop %v1522
  %v1524 = vmul.f32 %v1500, 1.442695
  %v1525 = vpow.pop %v1524
  %v1526 = vmul.f32 %v1501, 1.442695
  %v1527 = vpow.pop %v1526
  %v1528 = vmul.f32 %v1502, 1.442695
  %v1529 = vpow.pop %v1528
  %v1530 = vmul.f32 %v1503, 1.442695
  %v1531 = vpow.pop %v1530
  %v1532 = vmul.f32 %v1504, 1.442695
  %v1533 = vpow.pop %v1532
  %v1534 = vmul.f32 %v1505, 1.442695
  %v1535 = vpow.pop %v1534
  %v1536 = vmul.f32 %v1506, 1.442695
  %v1537 = vpow.pop %v1536
  %v1538 = vmul.f32 %v1507, 1.442695
  %v1539 = vpow.pop %v1538
  %v1540 = vadd.f32 %v1509, 1.0
  %v1541 = vadd.f32 %v1511, 1.0
  %v1542 = vadd.f32 %v1513, 1.0
  %v1543 = vadd.f32 %v1515, 1.0
  %v1544 = vadd.f32 %v1517, 1.0
  %v1545 = vadd.f32 %v1519, 1.0
  %v1546 = vadd.f32 %v1521, 1.0
  %v1547 = vadd.f32 %v1523, 1.0
  %v1548 = vadd.f32 %v1525, 1.0
  %v1549 = vadd.f32 %v1527, 1.0
  %v1550 = vadd.f32 %v1529, 1.0
  %v1551 = vadd.f32 %v1531, 1.0
  %v1552 = vadd.f32 %v1533, 1.0
  %v1553 = vadd.f32 %v1535, 1.0
  %v1554 = vadd.f32 %v1537, 1.0
  %v1555 = vadd.f32 %v1539, 1.0
  %v1556 = vrcp.pop %v1540
  %v1557 = vmul.f32 %v1540, %v1556
  %v1558 = vsub.f32 1.0, %v1557
  %v1559 = vmul.f32 %v1556, %v1558
  %v1560 = vadd.f32 %v1556, %v1559
  %vm1561 = vweird.f32 %v1540
  %vm1562 = vweird.f32 %v1556
  %vm1563 = vmor %vm1561, %vm1562
  %v1564 = vsel %vm1563, %v1556, %v1560
  %v1565 = vand.u32 2147483647, %v1540
  %vm1566 = vcmp.eq.f32.partialorder %v1565, 8.507059e+37
  %v1567 = vand.u32 %v1540, 2147483648
  %v1568 = vor.u32 1.1754944e-38, %v1567
  %v1569 = vsel %vm1566, %v1568, %v1564
  %v1570 = vmul.f32 1.0, %v1569
  %v1571 = vrcp.pop %v1541
  %v1572 = vmul.f32 %v1541, %v1571
  %v1573 = vsub.f32 1.0, %v1572
  %v1574 = vmul.f32 %v1571, %v1573
  %v1575 = vadd.f32 %v1571, %v1574
  %vm1576 = vweird.f32 %v1541
  %vm1577 = vweird.f32 %v1571
  %vm1578 = vmor %vm1576, %vm1577
  %v1579 = vsel %vm1578, %v1571, %v1575
  %v1580 = vand.u32 2147483647, %v1541
  %vm1581 = vcmp.eq.f32.partialorder %v1580, 8.507059e+37
  %v1582 = vand.u32 %v1541, 2147483648
  %v1583 = vor.u32 1.1754944e-38, %v1582
  %v1584 = vsel %vm1581, %v1583, %v1579
  %v1585 = vmul.f32 1.0, %v1584
  %v1586 = vrcp.pop %v1542
  %v1587 = vmul.f32 %v1542, %v1586
  %v1588 = vsub.f32 1.0, %v1587
  %v1589 = vmul.f32 %v1586, %v1588
  %v1590 = vadd.f32 %v1586, %v1589
  %vm1591 = vweird.f32 %v1542
  %vm1592 = vweird.f32 %v1586
  %vm1593 = vmor %vm1591, %vm1592
  %v1594 = vsel %vm1593, %v1586, %v1590
  %v1595 = vand.u32 2147483647, %v1542
  %vm1596 = vcmp.eq.f32.partialorder %v1595, 8.507059e+37
  %v1597 = vand.u32 %v1542, 2147483648
  %v1598 = vor.u32 1.1754944e-38, %v1597
  %v1599 = vsel %vm1596, %v1598, %v1594
  %v1600 = vmul.f32 1.0, %v1599
  %v1601 = vrcp.pop %v1543
  %v1602 = vmul.f32 %v1543, %v1601
  %v1603 = vsub.f32 1.0, %v1602
  %v1604 = vmul.f32 %v1601, %v1603
  %v1605 = vadd.f32 %v1601, %v1604
  %vm1606 = vweird.f32 %v1543
  %vm1607 = vweird.f32 %v1601
  %vm1608 = vmor %vm1606, %vm1607
  %v1609 = vsel %vm1608, %v1601, %v1605
  %v1610 = vand.u32 2147483647, %v1543
  %vm1611 = vcmp.eq.f32.partialorder %v1610, 8.507059e+37
  %v1612 = vand.u32 %v1543, 2147483648
  %v1613 = vor.u32 1.1754944e-38, %v1612
  %v1614 = vsel %vm1611, %v1613, %v1609
  %v1615 = vmul.f32 1.0, %v1614
  %v1616 = vrcp.pop %v1544
  %v1617 = vmul.f32 %v1544, %v1616
  %v1618 = vsub.f32 1.0, %v1617
  %v1619 = vmul.f32 %v1616, %v1618
  %v1620 = vadd.f32 %v1616, %v1619
  %vm1621 = vweird.f32 %v1544
  %vm1622 = vweird.f32 %v1616
  %vm1623 = vmor %vm1621, %vm1622
  %v1624 = vsel %vm1623, %v1616, %v1620
  %v1625 = vand.u32 2147483647, %v1544
  %vm1626 = vcmp.eq.f32.partialorder %v1625, 8.507059e+37
  %v1627 = vand.u32 %v1544, 2147483648
  %v1628 = vor.u32 1.1754944e-38, %v1627
  %v1629 = vsel %vm1626, %v1628, %v1624
  %v1630 = vmul.f32 1.0, %v1629
  %v1631 = vrcp.pop %v1545
  %v1632 = vmul.f32 %v1545, %v1631
  %v1633 = vsub.f32 1.0, %v1632
  %v1634 = vmul.f32 %v1631, %v1633
  %v1635 = vadd.f32 %v1631, %v1634
  %vm1636 = vweird.f32 %v1545
  %vm1637 = vweird.f32 %v1631
  %vm1638 = vmor %vm1636, %vm1637
  %v1639 = vsel %vm1638, %v1631, %v1635
  %v1640 = vand.u32 2147483647, %v1545
  %vm1641 = vcmp.eq.f32.partialorder %v1640, 8.507059e+37
  %v1642 = vand.u32 %v1545, 2147483648
  %v1643 = vor.u32 1.1754944e-38, %v1642
  %v1644 = vsel %vm1641, %v1643, %v1639
  %v1645 = vmul.f32 1.0, %v1644
  %v1646 = vrcp.pop %v1546
  %v1647 = vmul.f32 %v1546, %v1646
  %v1648 = vsub.f32 1.0, %v1647
  %v1649 = vmul.f32 %v1646, %v1648
  %v1650 = vadd.f32 %v1646, %v1649
  %vm1651 = vweird.f32 %v1546
  %vm1652 = vweird.f32 %v1646
  %vm1653 = vmor %vm1651, %vm1652
  %v1654 = vsel %vm1653, %v1646, %v1650
  %v1655 = vand.u32 2147483647, %v1546
  %vm1656 = vcmp.eq.f32.partialorder %v1655, 8.507059e+37
  %v1657 = vand.u32 %v1546, 2147483648
  %v1658 = vor.u32 1.1754944e-38, %v1657
  %v1659 = vsel %vm1656, %v1658, %v1654
  %v1660 = vmul.f32 1.0, %v1659
  %v1661 = vrcp.pop %v1547
  %v1662 = vmul.f32 %v1547, %v1661
  %v1663 = vsub.f32 1.0, %v1662
  %v1664 = vmul.f32 %v1661, %v1663
  %v1665 = vadd.f32 %v1661, %v1664
  %vm1666 = vweird.f32 %v1547
  %vm1667 = vweird.f32 %v1661
  %vm1668 = vmor %vm1666, %vm1667
  %v1669 = vsel %vm1668, %v1661, %v1665
  %v1670 = vand.u32 2147483647, %v1547
  %vm1671 = vcmp.eq.f32.partialorder %v1670, 8.507059e+37
  %v1672 = vand.u32 %v1547, 2147483648
  %v1673 = vor.u32 1.1754944e-38, %v1672
  %v1674 = vsel %vm1671, %v1673, %v1669
  %v1675 = vmul.f32 1.0, %v1674
  %v1676 = vrcp.pop %v1548
  %v1677 = vmul.f32 %v1548, %v1676
  %v1678 = vsub.f32 1.0, %v1677
  %v1679 = vmul.f32 %v1676, %v1678
  %v1680 = vadd.f32 %v1676, %v1679
  %vm1681 = vweird.f32 %v1548
  %vm1682 = vweird.f32 %v1676
  %vm1683 = vmor %vm1681, %vm1682
  %v1684 = vsel %vm1683, %v1676, %v1680
  %v1685 = vand.u32 2147483647, %v1548
  %vm1686 = vcmp.eq.f32.partialorder %v1685, 8.507059e+37
  %v1687 = vand.u32 %v1548, 2147483648
  %v1688 = vor.u32 1.1754944e-38, %v1687
  %v1689 = vsel %vm1686, %v1688, %v1684
  %v1690 = vmul.f32 1.0, %v1689
  %v1691 = vrcp.pop %v1549
  %v1692 = vmul.f32 %v1549, %v1691
  %v1693 = vsub.f32 1.0, %v1692
  %v1694 = vmul.f32 %v1691, %v1693
  %v1695 = vadd.f32 %v1691, %v1694
  %vm1696 = vweird.f32 %v1549
  %vm1697 = vweird.f32 %v1691
  %vm1698 = vmor %vm1696, %vm1697
  %v1699 = vsel %vm1698, %v1691, %v1695
  %v1700 = vand.u32 2147483647, %v1549
  %vm1701 = vcmp.eq.f32.partialorder %v1700, 8.507059e+37
  %v1702 = vand.u32 %v1549, 2147483648
  %v1703 = vor.u32 1.1754944e-38, %v1702
  %v1704 = vsel %vm1701, %v1703, %v1699
  %v1705 = vmul.f32 1.0, %v1704
  %v1706 = vrcp.pop %v1550
  %v1707 = vmul.f32 %v1550, %v1706
  %v1708 = vsub.f32 1.0, %v1707
  %v1709 = vmul.f32 %v1706, %v1708
  %v1710 = vadd.f32 %v1706, %v1709
  %vm1711 = vweird.f32 %v1550
  %vm1712 = vweird.f32 %v1706
  %vm1713 = vmor %vm1711, %vm1712
  %v1714 = vsel %vm1713, %v1706, %v1710
  %v1715 = vand.u32 2147483647, %v1550
  %vm1716 = vcmp.eq.f32.partialorder %v1715, 8.507059e+37
  %v1717 = vand.u32 %v1550, 2147483648
  %v1718 = vor.u32 1.1754944e-38, %v1717
  %v1719 = vsel %vm1716, %v1718, %v1714
  %v1720 = vmul.f32 1.0, %v1719
  %v1721 = vrcp.pop %v1551
  %v1722 = vmul.f32 %v1551, %v1721
  %v1723 = vsub.f32 1.0, %v1722
  %v1724 = vmul.f32 %v1721, %v1723
  %v1725 = vadd.f32 %v1721, %v1724
  %vm1726 = vweird.f32 %v1551
  %vm1727 = vweird.f32 %v1721
  %vm1728 = vmor %vm1726, %vm1727
  %v1729 = vsel %vm1728, %v1721, %v1725
  %v1730 = vand.u32 2147483647, %v1551
  %vm1731 = vcmp.eq.f32.partialorder %v1730, 8.507059e+37
  %v1732 = vand.u32 %v1551, 2147483648
  %v1733 = vor.u32 1.1754944e-38, %v1732
  %v1734 = vsel %vm1731, %v1733, %v1729
  %v1735 = vmul.f32 1.0, %v1734
  %v1736 = vrcp.pop %v1552
  %v1737 = vmul.f32 %v1552, %v1736
  %v1738 = vsub.f32 1.0, %v1737
  %v1739 = vmul.f32 %v1736, %v1738
  %v1740 = vadd.f32 %v1736, %v1739
  %vm1741 = vweird.f32 %v1552
  %vm1742 = vweird.f32 %v1736
  %vm1743 = vmor %vm1741, %vm1742
  %v1744 = vsel %vm1743, %v1736, %v1740
  %v1745 = vand.u32 2147483647, %v1552
  %vm1746 = vcmp.eq.f32.partialorder %v1745, 8.507059e+37
  %v1747 = vand.u32 %v1552, 2147483648
  %v1748 = vor.u32 1.1754944e-38, %v1747
  %v1749 = vsel %vm1746, %v1748, %v1744
  %v1750 = vmul.f32 1.0, %v1749
  %v1751 = vrcp.pop %v1553
  %v1752 = vmul.f32 %v1553, %v1751
  %v1753 = vsub.f32 1.0, %v1752
  %v1754 = vmul.f32 %v1751, %v1753
  %v1755 = vadd.f32 %v1751, %v1754
  %vm1756 = vweird.f32 %v1553
  %vm1757 = vweird.f32 %v1751
  %vm1758 = vmor %vm1756, %vm1757
  %v1759 = vsel %vm1758, %v1751, %v1755
  %v1760 = vand.u32 2147483647, %v1553
  %vm1761 = vcmp.eq.f32.partialorder %v1760, 8.507059e+37
  %v1762 = vand.u32 %v1553, 2147483648
  %v1763 = vor.u32 1.1754944e-38, %v1762
  %v1764 = vsel %vm1761, %v1763, %v1759
  %v1765 = vmul.f32 1.0, %v1764
  %v1766 = vrcp.pop %v1554
  %v1767 = vmul.f32 %v1554, %v1766
  %v1768 = vsub.f32 1.0, %v1767
  %v1769 = vmul.f32 %v1766, %v1768
  %v1770 = vadd.f32 %v1766, %v1769
  %vm1771 = vweird.f32 %v1554
  %vm1772 = vweird.f32 %v1766
  %vm1773 = vmor %vm1771, %vm1772
  %v1774 = vsel %vm1773, %v1766, %v1770
  %v1775 = vand.u32 2147483647, %v1554
  %vm1776 = vcmp.eq.f32.partialorder %v1775, 8.507059e+37
  %v1777 = vand.u32 %v1554, 2147483648
  %v1778 = vor.u32 1.1754944e-38, %v1777
  %v1779 = vsel %vm1776, %v1778, %v1774
  %v1780 = vmul.f32 1.0, %v1779
  %v1781 = vrcp.pop %v1555
  %v1782 = vmul.f32 %v1555, %v1781
  %v1783 = vsub.f32 1.0, %v1782
  %v1784 = vmul.f32 %v1781, %v1783
  %v1785 = vadd.f32 %v1781, %v1784
  %vm1786 = vweird.f32 %v1555
  %vm1787 = vweird.f32 %v1781
  %vm1788 = vmor %vm1786, %vm1787
  %v1789 = vsel %vm1788, %v1781, %v1785
  %v1790 = vand.u32 2147483647, %v1555
  %vm1791 = vcmp.eq.f32.partialorder %v1790, 8.507059e+37
  %v1792 = vand.u32 %v1555, 2147483648
  %v1793 = vor.u32 1.1754944e-38, %v1792
  %v1794 = vsel %vm1791, %v1793, %v1789
  %v1795 = vmul.f32 1.0, %v1794
  %v1796 = vmul.f32 %v1145, %v1570
  %v1797 = vmul.f32 %v1168, %v1585
  %v1798 = vmul.f32 %v1191, %v1600
  %v1799 = vmul.f32 %v1214, %v1615
  %v1800 = vmul.f32 %v1237, %v1630
  %v1801 = vmul.f32 %v1260, %v1645
  %v1802 = vmul.f32 %v1283, %v1660
  %v1803 = vmul.f32 %v1306, %v1675
  %v1804 = vmul.f32 %v1329, %v1690
  %v1805 = vmul.f32 %v1352, %v1705
  %v1806 = vmul.f32 %v1375, %v1720
  %v1807 = vmul.f32 %v1398, %v1735
  %v1808 = vmul.f32 %v1421, %v1750
  %v1809 = vmul.f32 %v1444, %v1765
  %v1810 = vmul.f32 %v1467, %v1780
  %v1811 = vmul.f32 %v1490, %v1795
  %1812 = vmatpush.msra.mxu0 0.0
  %1813 = vmatpush.msra.mxu0 0.0
  %1814 = vmatpush.msra.mxu0 0.0
  %1815 = vmatpush.msra.mxu0 0.0
  %1816 = vmatpush.msra.mxu0 0.0
  %1817 = vmatpush.msra.mxu0 0.0
  %1818 = vmatpush.msra.mxu0 0.0
  %1819 = vmatpush.msra.mxu0 0.0
  %1820 = vmatpush.msra.mxu0 0.0
  %1821 = vmatpush.msra.mxu0 0.0
  %1822 = vmatpush.msra.mxu0 0.0
  %1823 = vmatpush.msra.mxu0 0.0
  %1824 = vmatpush.msra.mxu0 0.0
  %1825 = vmatpush.msra.mxu0 0.0
  %1826 = vmatpush.msra.mxu0 0.0
  %1827 = vmatpush.msra.mxu0 %v1796
  %1828 = vmatmul.f32.gmra.mxu0 %v753
  %v1829 = vpop.f32.mrf.mxu0
  %v1830 = vadd.f32 %v750, %v1829
  %1831 = vdwg.mxu0
  %1832 = vmatpush.msra.mxu0 0.0
  %1833 = vmatpush.msra.mxu0 0.0
  %1834 = vmatpush.msra.mxu0 0.0
  %1835 = vmatpush.msra.mxu0 0.0
  %1836 = vmatpush.msra.mxu0 0.0
  %1837 = vmatpush.msra.mxu0 0.0
  %1838 = vmatpush.msra.mxu0 0.0
  %1839 = vmatpush.msra.mxu0 0.0
  %1840 = vmatpush.msra.mxu0 0.0
  %1841 = vmatpush.msra.mxu0 0.0
  %1842 = vmatpush.msra.mxu0 0.0
  %1843 = vmatpush.msra.mxu0 0.0
  %1844 = vmatpush.msra.mxu0 0.0
  %1845 = vmatpush.msra.mxu0 0.0
  %1846 = vmatpush.msra.mxu0 0.0
  %1847 = vmatpush.msra.mxu0 %v1797
  %1848 = vmatmul.f32.gmra.mxu0 %v753
  %v1849 = vpop.f32.mrf.mxu0
  %v1850 = vadd.f32 %v750, %v1849
  %1851 = vdwg.mxu0
  %1852 = vmatpush.msra.mxu0 0.0
  %1853 = vmatpush.msra.mxu0 0.0
  %1854 = vmatpush.msra.mxu0 0.0
  %1855 = vmatpush.msra.mxu0 0.0
  %1856 = vmatpush.msra.mxu0 0.0
  %1857 = vmatpush.msra.mxu0 0.0
  %1858 = vmatpush.msra.mxu0 0.0
  %1859 = vmatpush.msra.mxu0 0.0
  %1860 = vmatpush.msra.mxu0 0.0
  %1861 = vmatpush.msra.mxu0 0.0
  %1862 = vmatpush.msra.mxu0 0.0
  %1863 = vmatpush.msra.mxu0 0.0
  %1864 = vmatpush.msra.mxu0 0.0
  %1865 = vmatpush.msra.mxu0 0.0
  %1866 = vmatpush.msra.mxu0 0.0
  %1867 = vmatpush.msra.mxu0 %v1798
  %1868 = vmatmul.f32.gmra.mxu0 %v753
  %v1869 = vpop.f32.mrf.mxu0
  %v1870 = vadd.f32 %v750, %v1869
  %1871 = vdwg.mxu0
  %1872 = vmatpush.msra.mxu0 0.0
  %1873 = vmatpush.msra.mxu0 0.0
  %1874 = vmatpush.msra.mxu0 0.0
  %1875 = vmatpush.msra.mxu0 0.0
  %1876 = vmatpush.msra.mxu0 0.0
  %1877 = vmatpush.msra.mxu0 0.0
  %1878 = vmatpush.msra.mxu0 0.0
  %1879 = vmatpush.msra.mxu0 0.0
  %1880 = vmatpush.msra.mxu0 0.0
  %1881 = vmatpush.msra.mxu0 0.0
  %1882 = vmatpush.msra.mxu0 0.0
  %1883 = vmatpush.msra.mxu0 0.0
  %1884 = vmatpush.msra.mxu0 0.0
  %1885 = vmatpush.msra.mxu0 0.0
  %1886 = vmatpush.msra.mxu0 0.0
  %1887 = vmatpush.msra.mxu0 %v1799
  %1888 = vmatmul.f32.gmra.mxu0 %v753
  %v1889 = vpop.f32.mrf.mxu0
  %v1890 = vadd.f32 %v750, %v1889
  %1891 = vdwg.mxu0
  %1892 = vmatpush.msra.mxu0 0.0
  %1893 = vmatpush.msra.mxu0 0.0
  %1894 = vmatpush.msra.mxu0 0.0
  %1895 = vmatpush.msra.mxu0 0.0
  %1896 = vmatpush.msra.mxu0 0.0
  %1897 = vmatpush.msra.mxu0 0.0
  %1898 = vmatpush.msra.mxu0 0.0
  %1899 = vmatpush.msra.mxu0 0.0
  %1900 = vmatpush.msra.mxu0 0.0
  %1901 = vmatpush.msra.mxu0 0.0
  %1902 = vmatpush.msra.mxu0 0.0
  %1903 = vmatpush.msra.mxu0 0.0
  %1904 = vmatpush.msra.mxu0 0.0
  %1905 = vmatpush.msra.mxu0 0.0
  %1906 = vmatpush.msra.mxu0 0.0
  %1907 = vmatpush.msra.mxu0 %v1800
  %1908 = vmatmul.f32.gmra.mxu0 %v753
  %v1909 = vpop.f32.mrf.mxu0
  %v1910 = vadd.f32 %v750, %v1909
  %1911 = vdwg.mxu0
  %1912 = vmatpush.msra.mxu0 0.0
  %1913 = vmatpush.msra.mxu0 0.0
  %1914 = vmatpush.msra.mxu0 0.0
  %1915 = vmatpush.msra.mxu0 0.0
  %1916 = vmatpush.msra.mxu0 0.0
  %1917 = vmatpush.msra.mxu0 0.0
  %1918 = vmatpush.msra.mxu0 0.0
  %1919 = vmatpush.msra.mxu0 0.0
  %1920 = vmatpush.msra.mxu0 0.0
  %1921 = vmatpush.msra.mxu0 0.0
  %1922 = vmatpush.msra.mxu0 0.0
  %1923 = vmatpush.msra.mxu0 0.0
  %1924 = vmatpush.msra.mxu0 0.0
  %1925 = vmatpush.msra.mxu0 0.0
  %1926 = vmatpush.msra.mxu0 0.0
  %1927 = vmatpush.msra.mxu0 %v1801
  %1928 = vmatmul.f32.gmra.mxu0 %v753
  %v1929 = vpop.f32.mrf.mxu0
  %v1930 = vadd.f32 %v750, %v1929
  %1931 = vdwg.mxu0
  %1932 = vmatpush.msra.mxu0 0.0
  %1933 = vmatpush.msra.mxu0 0.0
  %1934 = vmatpush.msra.mxu0 0.0
  %1935 = vmatpush.msra.mxu0 0.0
  %1936 = vmatpush.msra.mxu0 0.0
  %1937 = vmatpush.msra.mxu0 0.0
  %1938 = vmatpush.msra.mxu0 0.0
  %1939 = vmatpush.msra.mxu0 0.0
  %1940 = vmatpush.msra.mxu0 0.0
  %1941 = vmatpush.msra.mxu0 0.0
  %1942 = vmatpush.msra.mxu0 0.0
  %1943 = vmatpush.msra.mxu0 0.0
  %1944 = vmatpush.msra.mxu0 0.0
  %1945 = vmatpush.msra.mxu0 0.0
  %1946 = vmatpush.msra.mxu0 0.0
  %1947 = vmatpush.msra.mxu0 %v1802
  %1948 = vmatmul.f32.gmra.mxu0 %v753
  %v1949 = vpop.f32.mrf.mxu0
  %v1950 = vadd.f32 %v750, %v1949
  %1951 = vdwg.mxu0
  %1952 = vmatpush.msra.mxu0 0.0
  %1953 = vmatpush.msra.mxu0 0.0
  %1954 = vmatpush.msra.mxu0 0.0
  %1955 = vmatpush.msra.mxu0 0.0
  %1956 = vmatpush.msra.mxu0 0.0
  %1957 = vmatpush.msra.mxu0 0.0
  %1958 = vmatpush.msra.mxu0 0.0
  %1959 = vmatpush.msra.mxu0 0.0
  %1960 = vmatpush.msra.mxu0 0.0
  %1961 = vmatpush.msra.mxu0 0.0
  %1962 = vmatpush.msra.mxu0 0.0
  %1963 = vmatpush.msra.mxu0 0.0
  %1964 = vmatpush.msra.mxu0 0.0
  %1965 = vmatpush.msra.mxu0 0.0
  %1966 = vmatpush.msra.mxu0 0.0
  %1967 = vmatpush.msra.mxu0 %v1803
  %1968 = vmatmul.f32.gmra.mxu0 %v753
  %v1969 = vpop.f32.mrf.mxu0
  %v1970 = vadd.f32 %v750, %v1969
  %1971 = vdwg.mxu0
  %1972 = vmatpush.msra.mxu0 0.0
  %1973 = vmatpush.msra.mxu0 0.0
  %1974 = vmatpush.msra.mxu0 0.0
  %1975 = vmatpush.msra.mxu0 0.0
  %1976 = vmatpush.msra.mxu0 0.0
  %1977 = vmatpush.msra.mxu0 0.0
  %1978 = vmatpush.msra.mxu0 0.0
  %1979 = vmatpush.msra.mxu0 0.0
  %1980 = vmatpush.msra.mxu0 0.0
  %1981 = vmatpush.msra.mxu0 0.0
  %1982 = vmatpush.msra.mxu0 0.0
  %1983 = vmatpush.msra.mxu0 0.0
  %1984 = vmatpush.msra.mxu0 0.0
  %1985 = vmatpush.msra.mxu0 0.0
  %1986 = vmatpush.msra.mxu0 0.0
  %1987 = vmatpush.msra.mxu0 %v1804
  %1988 = vmatmul.f32.gmra.mxu0 %v753
  %v1989 = vpop.f32.mrf.mxu0
  %v1990 = vadd.f32 %v750, %v1989
  %1991 = vdwg.mxu0
  %1992 = vmatpush.msra.mxu0 0.0
  %1993 = vmatpush.msra.mxu0 0.0
  %1994 = vmatpush.msra.mxu0 0.0
  %1995 = vmatpush.msra.mxu0 0.0
  %1996 = vmatpush.msra.mxu0 0.0
  %1997 = vmatpush.msra.mxu0 0.0
  %1998 = vmatpush.msra.mxu0 0.0
  %1999 = vmatpush.msra.mxu0 0.0
  %2000 = vmatpush.msra.mxu0 0.0
  %2001 = vmatpush.msra.mxu0 0.0
  %2002 = vmatpush.msra.mxu0 0.0
  %2003 = vmatpush.msra.mxu0 0.0
  %2004 = vmatpush.msra.mxu0 0.0
  %2005 = vmatpush.msra.mxu0 0.0
  %2006 = vmatpush.msra.mxu0 0.0
  %2007 = vmatpush.msra.mxu0 %v1805
  %2008 = vmatmul.f32.gmra.mxu0 %v753
  %v2009 = vpop.f32.mrf.mxu0
  %v2010 = vadd.f32 %v750, %v2009
  %2011 = vdwg.mxu0
  %2012 = vmatpush.msra.mxu0 0.0
  %2013 = vmatpush.msra.mxu0 0.0
  %2014 = vmatpush.msra.mxu0 0.0
  %2015 = vmatpush.msra.mxu0 0.0
  %2016 = vmatpush.msra.mxu0 0.0
  %2017 = vmatpush.msra.mxu0 0.0
  %2018 = vmatpush.msra.mxu0 0.0
  %2019 = vmatpush.msra.mxu0 0.0
  %2020 = vmatpush.msra.mxu0 0.0
  %2021 = vmatpush.msra.mxu0 0.0
  %2022 = vmatpush.msra.mxu0 0.0
  %2023 = vmatpush.msra.mxu0 0.0
  %2024 = vmatpush.msra.mxu0 0.0
  %2025 = vmatpush.msra.mxu0 0.0
  %2026 = vmatpush.msra.mxu0 0.0
  %2027 = vmatpush.msra.mxu0 %v1806
  %2028 = vmatmul.f32.gmra.mxu0 %v753
  %v2029 = vpop.f32.mrf.mxu0
  %v2030 = vadd.f32 %v750, %v2029
  %2031 = vdwg.mxu0
  %2032 = vmatpush.msra.mxu0 0.0
  %2033 = vmatpush.msra.mxu0 0.0
  %2034 = vmatpush.msra.mxu0 0.0
  %2035 = vmatpush.msra.mxu0 0.0
  %2036 = vmatpush.msra.mxu0 0.0
  %2037 = vmatpush.msra.mxu0 0.0
  %2038 = vmatpush.msra.mxu0 0.0
  %2039 = vmatpush.msra.mxu0 0.0
  %2040 = vmatpush.msra.mxu0 0.0
  %2041 = vmatpush.msra.mxu0 0.0
  %2042 = vmatpush.msra.mxu0 0.0
  %2043 = vmatpush.msra.mxu0 0.0
  %2044 = vmatpush.msra.mxu0 0.0
  %2045 = vmatpush.msra.mxu0 0.0
  %2046 = vmatpush.msra.mxu0 0.0
  %2047 = vmatpush.msra.mxu0 %v1807
  %2048 = vmatmul.f32.gmra.mxu0 %v753
  %v2049 = vpop.f32.mrf.mxu0
  %v2050 = vadd.f32 %v750, %v2049
  %2051 = vdwg.mxu0
  %2052 = vmatpush.msra.mxu0 0.0
  %2053 = vmatpush.msra.mxu0 0.0
  %2054 = vmatpush.msra.mxu0 0.0
  %2055 = vmatpush.msra.mxu0 0.0
  %2056 = vmatpush.msra.mxu0 0.0
  %2057 = vmatpush.msra.mxu0 0.0
  %2058 = vmatpush.msra.mxu0 0.0
  %2059 = vmatpush.msra.mxu0 0.0
  %2060 = vmatpush.msra.mxu0 0.0
  %2061 = vmatpush.msra.mxu0 0.0
  %2062 = vmatpush.msra.mxu0 0.0
  %2063 = vmatpush.msra.mxu0 0.0
  %2064 = vmatpush.msra.mxu0 0.0
  %2065 = vmatpush.msra.mxu0 0.0
  %2066 = vmatpush.msra.mxu0 0.0
  %2067 = vmatpush.msra.mxu0 %v1808
  %2068 = vmatmul.f32.gmra.mxu0 %v753
  %v2069 = vpop.f32.mrf.mxu0
  %v2070 = vadd.f32 %v750, %v2069
  %2071 = vdwg.mxu0
  %2072 = vmatpush.msra.mxu0 0.0
  %2073 = vmatpush.msra.mxu0 0.0
  %2074 = vmatpush.msra.mxu0 0.0
  %2075 = vmatpush.msra.mxu0 0.0
  %2076 = vmatpush.msra.mxu0 0.0
  %2077 = vmatpush.msra.mxu0 0.0
  %2078 = vmatpush.msra.mxu0 0.0
  %2079 = vmatpush.msra.mxu0 0.0
  %2080 = vmatpush.msra.mxu0 0.0
  %2081 = vmatpush.msra.mxu0 0.0
  %2082 = vmatpush.msra.mxu0 0.0
  %2083 = vmatpush.msra.mxu0 0.0
  %2084 = vmatpush.msra.mxu0 0.0
  %2085 = vmatpush.msra.mxu0 0.0
  %2086 = vmatpush.msra.mxu0 0.0
  %2087 = vmatpush.msra.mxu0 %v1809
  %2088 = vmatmul.f32.gmra.mxu0 %v753
  %v2089 = vpop.f32.mrf.mxu0
  %v2090 = vadd.f32 %v750, %v2089
  %2091 = vdwg.mxu0
  %2092 = vmatpush.msra.mxu0 0.0
  %2093 = vmatpush.msra.mxu0 0.0
  %2094 = vmatpush.msra.mxu0 0.0
  %2095 = vmatpush.msra.mxu0 0.0
  %2096 = vmatpush.msra.mxu0 0.0
  %2097 = vmatpush.msra.mxu0 0.0
  %2098 = vmatpush.msra.mxu0 0.0
  %2099 = vmatpush.msra.mxu0 0.0
  %2100 = vmatpush.msra.mxu0 0.0
  %2101 = vmatpush.msra.mxu0 0.0
  %2102 = vmatpush.msra.mxu0 0.0
  %2103 = vmatpush.msra.mxu0 0.0
  %2104 = vmatpush.msra.mxu0 0.0
  %2105 = vmatpush.msra.mxu0 0.0
  %2106 = vmatpush.msra.mxu0 0.0
  %2107 = vmatpush.msra.mxu0 %v1810
  %2108 = vmatmul.f32.gmra.mxu0 %v753
  %v2109 = vpop.f32.mrf.mxu0
  %v2110 = vadd.f32 %v750, %v2109
  %2111 = vdwg.mxu0
  %2112 = vmatpush.msra.mxu0 0.0
  %2113 = vmatpush.msra.mxu0 0.0
  %2114 = vmatpush.msra.mxu0 0.0
  %2115 = vmatpush.msra.mxu0 0.0
  %2116 = vmatpush.msra.mxu0 0.0
  %2117 = vmatpush.msra.mxu0 0.0
  %2118 = vmatpush.msra.mxu0 0.0
  %2119 = vmatpush.msra.mxu0 0.0
  %2120 = vmatpush.msra.mxu0 0.0
  %2121 = vmatpush.msra.mxu0 0.0
  %2122 = vmatpush.msra.mxu0 0.0
  %2123 = vmatpush.msra.mxu0 0.0
  %2124 = vmatpush.msra.mxu0 0.0
  %2125 = vmatpush.msra.mxu0 0.0
  %2126 = vmatpush.msra.mxu0 0.0
  %2127 = vmatpush.msra.mxu0 %v1811
  %2128 = vmatmul.f32.gmra.mxu0 %v753
  %v2129 = vpop.f32.mrf.mxu0
  %v2130 = vadd.f32 %v750, %v2129
  %2131 = vdwg.mxu0
  %v2132 = vadd.f32 %v1830, %v1108
  %v2133 = vadd.f32 %v1850, %v1109
  %v2134 = vadd.f32 %v1870, %v1110
  %v2135 = vadd.f32 %v1890, %v1111
  %v2136 = vadd.f32 %v1910, %v1112
  %v2137 = vadd.f32 %v1930, %v1113
  %v2138 = vadd.f32 %v1950, %v1114
  %v2139 = vadd.f32 %v1970, %v1115
  %v2140 = vadd.f32 %v1990, %v1116
  %v2141 = vadd.f32 %v2010, %v1117
  %v2142 = vadd.f32 %v2030, %v1118
  %v2143 = vadd.f32 %v2050, %v1119
  %v2144 = vadd.f32 %v2070, %v1120
  %v2145 = vadd.f32 %v2090, %v1121
  %v2146 = vadd.f32 %v2110, %v1122
  %v2147 = vadd.f32 %v2130, %v1123
  %s2148 = scalar_lea.vmem %s5, 128
  %2149 = vst [vmem:[%s2148] sm:$0xff] %v2132
  %2150 = vst [vmem:[%s2148 + $0x8] sm:$0xff] %v2133
  %2151 = vst [vmem:[%s2148 + $0x10] sm:$0xff] %v2134
  %2152 = vst [vmem:[%s2148 + $0x18] sm:$0xff] %v2135
  %2153 = vst [vmem:[%s2148 + $0x20] sm:$0xff] %v2136
  %2154 = vst [vmem:[%s2148 + $0x28] sm:$0xff] %v2137
  %2155 = vst [vmem:[%s2148 + $0x30] sm:$0xff] %v2138
  %2156 = vst [vmem:[%s2148 + $0x38] sm:$0xff] %v2139
  %2157 = vst [vmem:[%s2148 + $0x40] sm:$0xff] %v2140
  %2158 = vst [vmem:[%s2148 + $0x48] sm:$0xff] %v2141
  %2159 = vst [vmem:[%s2148 + $0x50] sm:$0xff] %v2142
  %2160 = vst [vmem:[%s2148 + $0x58] sm:$0xff] %v2143
  %2161 = vst [vmem:[%s2148 + $0x60] sm:$0xff] %v2144
  %2162 = vst [vmem:[%s2148 + $0x68] sm:$0xff] %v2145
  %2163 = vst [vmem:[%s2148 + $0x70] sm:$0xff] %v2146
  %2164 = vst [vmem:[%s2148 + $0x78] sm:$0xff] %v2147
  // Predicated region
  $region22: #{simple_nonlocal_block_video.1} parent=0 // pred_check
    _
  $region23: #{simple_nonlocal_block_video.1} parent=0 // pred_check_branch
    %2166 = sbr.rel (0) target = $region25
  $region24: #{simple_nonlocal_block_video.1} parent=0 // pred_region
    _
  $region25: #{simple_nonlocal_block_video.1} parent=0 // pred_fallthru
    _
  // Predicated region
  $region26: #{simple_nonlocal_block_video.1} parent=0 // pred_check
    _
  $region27: #{simple_nonlocal_block_video.1} parent=0 // pred_check_branch
    %2168 = sbr.rel (0) target = $region29
  $region28: #{simple_nonlocal_block_video.1} parent=0 // pred_region
    _
  $region29: #{simple_nonlocal_block_video.1} parent=0 // pred_fallthru
    _

</llo_original>
